<compile_context>
chip_gen: v6e
topology: v6e:2x2x1
jax: 0.10.0
libtpu: 0.0.40
codegen_flags: <defaults>
</compile_context>

<pallas_src>
import math

import jax
import jax.numpy as jnp
from jax.experimental import pallas as pl
from jax.experimental.pallas import tpu as pltpu


# ---------------------------------------------------------------------------
# Small helpers
# ---------------------------------------------------------------------------
def _pick_tile(n, desired):
    """Largest multiple of 8 that divides n and is <= desired; else full n."""
    if n <= desired:
        return n
    t = (desired // 8) * 8
    while t >= 8:
        if n % t == 0:
            return t
        t -= 8
    return n


def _vmem_cap_bytes():
    """Physical VMEM of this generation (64 MiB on v7x, 128 MiB on v5e/v6e)."""
    try:
        return int(pltpu.get_tpu_info().vmem_capacity_bytes)
    except Exception:
        return 64 << 20          # conservative default (v7x per-TensorCore)


def _clamp_vmem(est_bytes):
    cap = _vmem_cap_bytes()
    hi = int(cap * 0.9)          # never request more than ~90% of physical VMEM
    return int(min(max(int(est_bytes), 32 << 20), hi))


def _cos_norm(x, eps=1e-6):
    """cosine_norm in f32 via rsqrt on the row-reduced sum of squares."""
    ss = jnp.sum(x * x, axis=-1, keepdims=True)
    return x * jax.lax.rsqrt(jnp.maximum(ss, eps * eps))


# ---------------------------------------------------------------------------
# Fused self-attention + nGPT residual cosine-norm
#   out = cos_norm(h + alpha_A * (cos_norm(attn(h)) - h))
# ---------------------------------------------------------------------------
def _attn_kernel(xq_ref, xkv_ref, wq_ref, wkv_ref, sqkq_ref, sqkk_ref,
                 mask_ref, wo_ref, alpha_ref, o_ref, acc_ref):
    head = pl.program_id(2)
    nheads = pl.num_programs(2)

    @pl.when(head == 0)
    def _init():
        acc_ref[...] = jnp.zeros_like(acc_ref)

    cdt = xq_ref.dtype
    xq = xq_ref[...]                                                   # (tq, D)
    xkv = xkv_ref[...]                                                 # (S,  D)

    q = jnp.dot(xq, wq_ref[...], preferred_element_type=jnp.float32)  # (tq, hd)
    kv = jnp.dot(xkv, wkv_ref[...], preferred_element_type=jnp.float32)  # (S, 2hd)
    hd = q.shape[-1]
    k = kv[:, :hd]
    v = kv[:, hd:]

    # cosine-norm + s_qk scale (qk_scale = sqrt(hd) already folded into sqkq)
    q = q * (sqkq_ref[...] * jax.lax.rsqrt(
        jnp.maximum(jnp.sum(q * q, axis=-1, keepdims=True), 1e-12)))
    k = k * (sqkk_ref[...] * jax.lax.rsqrt(
        jnp.maximum(jnp.sum(k * k, axis=-1, keepdims=True), 1e-12)))

    logits = jax.lax.dot_general(q, k, (((1,), (1,)), ((), ())),
                                 preferred_element_type=jnp.float32)  # (tq, S)
    logits = jnp.where(mask_ref[...] != 0, -1e9, logits)              # key mask

    m = jnp.max(logits, axis=-1, keepdims=True)
    p = jnp.exp(logits - m)
    probs = p * pl.reciprocal(jnp.sum(p, axis=-1, keepdims=True))     # per-row recip

    scores = jnp.dot(probs.astype(cdt), v.astype(cdt),
                     preferred_element_type=jnp.float32)              # (tq, hd)
    acc_ref[...] += jnp.dot(scores.astype(cdt), wo_ref[...],
                            preferred_element_type=jnp.float32)       # (tq, D)

    @pl.when(head == nheads - 1)
    def _finalize():
        h_in = xq.astype(jnp.float32)
        y = _cos_norm(acc_ref[...])
        out = _cos_norm(h_in + alpha_ref[...] * (y - h_in))
        o_ref[...] = out.astype(o_ref.dtype)


def prepare_attn_params(wq, wk, wv, wo, s_qk, alpha_A, *, num_heads,
                        compute_dtype=jnp.float32):
    """One-time prep: per-head (in, out) weights, fused K|V, folded scales."""
    dim = wq.shape[1]
    hd = wq.shape[0] // num_heads

    def split_heads(w):                          # (nh*hd, dim) -> (nh, dim, hd)
        return jnp.transpose(w.T.reshape(dim, num_heads, hd), (1, 0, 2))

    wq_h = split_heads(wq).astype(compute_dtype)
    wkv_h = jnp.concatenate([split_heads(wk), split_heads(wv)],
                            axis=-1).astype(compute_dtype)             # (nh, D, 2hd)
    wo_h = wo.T.reshape(num_heads, hd, dim).astype(compute_dtype)      # (nh, hd, D)

    # Scale(head_dim, heads, scale=1/sqrt(dim)): effective = s_qk * sqrt(dim)
    sqk_eff = (s_qk * math.sqrt(dim)).reshape(num_heads, 1, hd).astype(jnp.float32)
    sqk_q = sqk_eff * math.sqrt(hd)      # fold module's qk scale (sqrt(hd)) into q
    sqk_k = sqk_eff
    # Scale(dim, init=0.05, scale=1/sqrt(dim)): effective = alpha * 0.05 * sqrt(dim)
    alpha_eff = (alpha_A * (0.05 * math.sqrt(dim))).reshape(1, dim).astype(jnp.float32)
    return dict(wq_h=wq_h, wkv_h=wkv_h, wo_h=wo_h,
                sqk_q=sqk_q, sqk_k=sqk_k, alpha=alpha_eff)


def attention_residual_forward(x, mask_i32, p, *, tq_desired=256):
    B, S, D = x.shape
    nh, _, hd = p["wq_h"].shape
    cdt = p["wq_h"].dtype
    x_in = x if x.dtype == cdt else x.astype(cdt)

    tq = _pick_tile(S, tq_desired)
    nq = S // tq
    grid = (B, nq, nh)

    bpe = jnp.dtype(cdt).itemsize
    obpe = jnp.dtype(x.dtype).itemsize
    # double-buffered blocks + f32 acc + in-kernel working set + margin
    est = (2 * bpe * (tq * D + S * D + D * hd + D * 2 * hd + hd * D)
           + 2 * 4 * (2 * hd + S + D)
           + 2 * obpe * tq * D
           + 4 * tq * D
           + 4 * (3 * tq * S + tq * (3 * hd + D) + 3 * S * hd)
           + (4 << 20))
    # TODO(synk): for very long S add an inner KV-tile loop so the (S, D) x_kv
    # block and (S, hd) K/V do not have to be fully resident.
    vmem_limit = _clamp_vmem(est)

    flops = int(2 * B * nh * hd * (S * D * (2 + 2 * nq) + 2 * S * S))
    trans = int(B * nh * (S * S + 4 * S))
    bytes_accessed = int(bpe * (2 * B * S * D + B * nq * nh * (3 * D * hd + hd * D))
                         + obpe * B * S * D)

    return pl.pallas_call(
        _attn_kernel,
        out_shape=jax.ShapeDtypeStruct((B, S, D), x.dtype),
        grid_spec=pltpu.PrefetchScalarGridSpec(
            num_scalar_prefetch=0,
            grid=grid,
            in_specs=[
                pl.BlockSpec((None, tq, D), lambda b, qi, h: (b, qi, 0)),   # x (q rows / residual)
                pl.BlockSpec((None, S, D), lambda b, qi, h: (b, 0, 0)),     # x (kv rows)
                pl.BlockSpec((None, D, hd), lambda b, qi, h: (h, 0, 0)),    # Wq head
                pl.BlockSpec((None, D, 2 * hd), lambda b, qi, h: (h, 0, 0)),# Wk|Wv head
                pl.BlockSpec((None, 1, hd), lambda b, qi, h: (h, 0, 0)),    # s_qk (q side)
                pl.BlockSpec((None, 1, hd), lambda b, qi, h: (h, 0, 0)),    # s_qk (k side)
                pl.BlockSpec((None, 1, S), lambda b, qi, h: (b, 0, 0)),     # key mask
                pl.BlockSpec((None, hd, D), lambda b, qi, h: (h, 0, 0)),    # Wo head
                pl.BlockSpec((1, D), lambda b, qi, h: (0, 0)),              # alpha_A (eff)
            ],
            out_specs=pl.BlockSpec((None, tq, D), lambda b, qi, h: (b, qi, 0)),
            scratch_shapes=[pltpu.VMEM((tq, D), jnp.float32)],
        ),
        compiler_params=pltpu.CompilerParams(
            dimension_semantics=("parallel", "parallel", "arbitrary"),
            vmem_limit_bytes=vmem_limit),
        cost_estimate=pl.CostEstimate(flops=flops, transcendentals=trans,
                                      bytes_accessed=bytes_accessed),
    )(x_in, x_in, p["wq_h"], p["wkv_h"], p["sqk_q"], p["sqk_k"],
      mask_i32, p["wo_h"], p["alpha"])


# ---------------------------------------------------------------------------
# Fused MLP + nGPT residual cosine-norm
#   out = cos_norm(h + alpha_M * (cos_norm(mlp(h)) - h))
# ---------------------------------------------------------------------------
def _mlp_kernel(x_ref, wup_ref, wgate_ref, wdown_ref, alpha_ref, o_ref,
                acc_ref=None):
    hstep = pl.program_id(2)
    nsteps = pl.num_programs(2)

    x = x_ref[...]                                                     # (tq, D)
    u = jnp.dot(x, wup_ref[...], preferred_element_type=jnp.float32)  # s_u folded in
    v = jnp.dot(x, wgate_ref[...], preferred_element_type=jnp.float32)  # s_v*sqrt(D) folded in
    hidden = u * (v * jax.nn.sigmoid(v))                               # u * silu(v), f32
    down = jnp.dot(hidden.astype(wdown_ref.dtype), wdown_ref[...],
                   preferred_element_type=jnp.float32)                 # (tq, D)

    def _finalize(total):
        h_in = x.astype(jnp.float32)
        y = _cos_norm(total)
        out = _cos_norm(h_in + alpha_ref[...] * (y - h_in))
        o_ref[...] = out.astype(o_ref.dtype)

    if acc_ref is None:            # hidden axis not tiled: no accumulator traffic
        _finalize(down)
    else:
        @pl.when(hstep == 0)
        def _init():
            acc_ref[...] = jnp.zeros_like(acc_ref)

        acc_ref[...] += down

        @pl.when(hstep == nsteps - 1)
        def _fin():
            _finalize(acc_ref[...])


def prepare_mlp_params(wup, wgate, wdown, s_u, s_v, alpha_M, *,
                       compute_dtype=jnp.float32):
    """One-time prep: (in, out) transposes with Scale() factors folded in."""
    input_dim = wup.shape[1]
    dim_out = wdown.shape[0]
    su_eff = jnp.reshape(s_u, (1, -1))                       # Scale: s * (1/1)
    sv_eff = jnp.reshape(s_v, (1, -1)) * math.sqrt(input_dim)
    wup_t = (wup.T * su_eff).astype(compute_dtype)           # (D, H)
    wgate_t = (wgate.T * sv_eff).astype(compute_dtype)       # (D, H)
    wdown_t = wdown.T.astype(compute_dtype)                  # (H, D)
    alpha_eff = (alpha_M * (0.05 * math.sqrt(dim_out))).reshape(
        1, dim_out).astype(jnp.float32)
    return dict(wup_t=wup_t, wgate_t=wgate_t, wdown_t=wdown_t, alpha=alpha_eff)


def _mlp_vmem_estimate(tq, D, th, H, bpe, obpe):
    need_acc = th < H
    return (2 * bpe * (tq * D + 2 * D * th + th * D)   # x, Wup, Wgate, Wdown (dbl buf)
            + 2 * 4 * D                                # alpha
            + 2 * obpe * tq * D                        # out
            + (4 * tq * D if need_acc else 0)          # f32 accumulator
            + 4 * (3 * tq * th + tq * D)               # u, v, hidden, down working set
            + (4 << 20))


def mlp_residual_forward(x, p, *, tq_desired=256, th=None):
    B, S, D = x.shape
    H = p["wup_t"].shape[1]
    cdt = p["wup_t"].dtype
    x_in = x if x.dtype == cdt else x.astype(cdt)

    tq = _pick_tile(S, tq_desired)
    nq = S // tq

    bpe = jnp.dtype(cdt).itemsize
    obpe = jnp.dtype(x.dtype).itemsize

    if th is None:
        # keep full weights resident when they fit (v5e/v6e 128 MiB);
        # fall back to lane-aligned hidden tiles when they don't (v7x 64 MiB).
        budget = int(_vmem_cap_bytes() * 0.9)
        cands = [H] + [t for t in (4096, 2048, 1024, 512, 256, 128)
                       if t < H and H % t == 0]
        th = cands[-1]
        for t in cands:
            if _mlp_vmem_estimate(tq, D, t, H, bpe, obpe) <= budget:
                th = t
                break
    else:
        th = min(th, H)
        assert H % th == 0, "hidden tile must divide H"
    nH = H // th
    grid = (B, nq, nH)

    vmem_limit = _clamp_vmem(_mlp_vmem_estimate(tq, D, th, H, bpe, obpe))
    flops = int(6 * B * S * D * H)
    trans = int(B * S * H + 4 * B * S)
    bytes_accessed = int(bpe * (B * S * D + B * nq * 3 * D * H) + obpe * B * S * D)

    scratch = [] if nH == 1 else [pltpu.VMEM((tq, D), jnp.float32)]

    return pl.pallas_call(
        _mlp_kernel,
        out_shape=jax.ShapeDtypeStruct((B, S, D), x.dtype),
        grid_spec=pltpu.PrefetchScalarGridSpec(
            num_scalar_prefetch=0,
            grid=grid,
            in_specs=[
                pl.BlockSpec((None, tq, D), lambda b, qi, hh: (b, qi, 0)),  # x rows
                pl.BlockSpec((D, th), lambda b, qi, hh: (0, hh)),           # Wup^T * s_u
                pl.BlockSpec((D, th), lambda b, qi, hh: (0, hh)),           # Wgate^T * s_v*sqrt(D)
                pl.BlockSpec((th, D), lambda b, qi, hh: (hh, 0)),           # Wdown^T
                pl.BlockSpec((1, D), lambda b, qi, hh: (0, 0)),             # alpha_M (eff)
            ],
            out_specs=pl.BlockSpec((None, tq, D), lambda b, qi, hh: (b, qi, 0)),
            scratch_shapes=scratch,
        ),
        compiler_params=pltpu.CompilerParams(
            dimension_semantics=("parallel", "parallel", "arbitrary"),
            vmem_limit_bytes=vmem_limit),
        cost_estimate=pl.CostEstimate(flops=flops, transcendentals=trans,
                                      bytes_accessed=bytes_accessed),
    )(x_in, p["wup_t"], p["wgate_t"], p["wdown_t"], p["alpha"])


# ---------------------------------------------------------------------------
# Final output projection (s_z folded into the weight columns)
# ---------------------------------------------------------------------------
def _matmul_kernel(x_ref, w_ref, o_ref):
    o_ref[...] = jnp.dot(x_ref[...], w_ref[...],
                         preferred_element_type=jnp.float32).astype(o_ref.dtype)


def output_projection(x, w_t, *, tq_desired=256):
    B, S, D = x.shape
    Dout = w_t.shape[1]
    cdt = w_t.dtype
    x_in = x if x.dtype == cdt else x.astype(cdt)

    tq = _pick_tile(S, tq_desired)
    nq = S // tq
    bpe = jnp.dtype(cdt).itemsize
    obpe = jnp.dtype(x.dtype).itemsize
    est = (2 * bpe * (tq * D + D * Dout) + 2 * obpe * tq * Dout
           + 4 * tq * Dout + (4 << 20))

    return pl.pallas_call(
        _matmul_kernel,
        out_shape=jax.ShapeDtypeStruct((B, S, Dout), x.dtype),
        grid_spec=pltpu.PrefetchScalarGridSpec(
            num_scalar_prefetch=0,
            grid=(B, nq),
            in_specs=[
                pl.BlockSpec((None, tq, D), lambda b, qi: (b, qi, 0)),
                pl.BlockSpec((D, Dout), lambda b, qi: (0, 0)),
            ],
            out_specs=pl.BlockSpec((None, tq, Dout), lambda b, qi: (b, qi, 0)),
        ),
        compiler_params=pltpu.CompilerParams(
            dimension_semantics=("parallel", "parallel"),
            vmem_limit_bytes=_clamp_vmem(est)),
        cost_estimate=pl.CostEstimate(
            flops=int(2 * B * S * D * Dout),
            transcendentals=0,
            bytes_accessed=int(bpe * (B * S * D + B * nq * D * Dout)
                               + obpe * B * S * Dout)),
    )(x_in, w_t)


# ---------------------------------------------------------------------------
# Full encoder forward (all transposes / scale folding hoisted into prepare_*)
# ---------------------------------------------------------------------------
def prepare_encoder_params(raw, *, dim, num_heads, compute_dtype=jnp.float32):
    layers = []
    for lraw in raw["layers"]:
        layers.append(dict(
            attn=prepare_attn_params(lraw["wq"], lraw["wk"], lraw["wv"], lraw["wo"],
                                     lraw["s_qk"], lraw["alpha_A"],
                                     num_heads=num_heads,
                                     compute_dtype=compute_dtype),
            mlp=prepare_mlp_params(lraw["wup"], lraw["wgate"], lraw["wdown"],
                                   lraw["s_u"], lraw["s_v"], lraw["alpha_M"],
                                   compute_dtype=compute_dtype),
        ))
    s_z_eff = (raw["s_z"] * math.sqrt(dim)).reshape(1, dim)   # Scale(scale=1/sqrt(dim))
    w_out_scaled_t = (raw["w_out"].T * s_z_eff).astype(compute_dtype)
    return layers, w_out_scaled_t


def ngpt_encoder_forward(x, mask, layer_params, w_out_scaled_t):
    B, S, D = x.shape
    mask_i32 = mask.astype(jnp.int32).reshape(B, 1, S)
    # activations ride in the compute dtype; residual/norm math is f32 in-kernel
    act_dtype = layer_params[0]["attn"]["wq_h"].dtype if layer_params else x.dtype
    h = x if x.dtype == act_dtype else x.astype(act_dtype)
    for lp in layer_params:
        h = attention_residual_forward(h, mask_i32, lp["attn"])
        h = mlp_residual_forward(h, lp["mlp"])
    logits = h
    scaled = output_projection(h, w_out_scaled_t)
    return logits, scaled


# ---------------------------------------------------------------------------
# Pure-JAX reference mirroring the PyTorch module.
# ---------------------------------------------------------------------------
def _cosine_norm_ref(x, axis=-1):
    norm = jnp.maximum(jnp.linalg.norm(x, axis=axis, keepdims=True), 1e-6)
    return x / norm


def ngpt_encoder_reference(x, mask, raw, *, dim, num_heads):
    nh = num_heads
    hd = dim // nh
    for lraw in raw["layers"]:
        B, S, D = x.shape
        q = x @ lraw["wq"].T
        k = x @ lraw["wk"].T
        v = x @ lraw["wv"].T
        q = q.reshape(B, S, nh, hd)
        k = k.reshape(B, S, nh, hd)
        v = v.reshape(B, S, nh, hd)
        s_qk = lraw["s_qk"] * math.sqrt(dim)
        q = _cosine_norm_ref(q) * s_qk
        k = _cosine_norm_ref(k) * s_qk
        q, k, v = (t.transpose(0, 2, 1, 3) for t in (q, k, v))
        logits = (q @ jnp.swapaxes(k, -2, -1)) * math.sqrt(hd)
        logits = jnp.where(mask[:, None, None, :], -1e9, logits)
        scores = jax.nn.softmax(logits, axis=-1) @ v
        scores = scores.transpose(0, 2, 1, 3).reshape(B, S, nh * hd)
        attn_out = scores @ lraw["wo"].T
        h_A = _cosine_norm_ref(attn_out)
        alpha_A = lraw["alpha_A"] * (0.05 * math.sqrt(dim))
        x = _cosine_norm_ref(x + alpha_A * (h_A - x))
        u = x @ lraw["wup"].T
        vg = x @ lraw["wgate"].T
        u = u * lraw["s_u"]
        vg = vg * lraw["s_v"] * math.sqrt(dim)
        mlp_out = (u * jax.nn.silu(vg)) @ lraw["wdown"].T
        h_M = _cosine_norm_ref(mlp_out)
        alpha_M = lraw["alpha_M"] * (0.05 * math.sqrt(dim))
        x = _cosine_norm_ref(x + alpha_M * (h_M - x))
    logits_out = x
    scaled = (x @ raw["w_out"].T) * (raw["s_z"] * math.sqrt(dim))
    return logits_out, scaled


if __name__ == "__main__":
    key = jax.random.PRNGKey(0)
    B, S = 2, 8
    dim, num_heads, num_layers = 32, 4, 2
    hidden = 64          # cfg.mlp_hidden_mult = 3 -> int(dim * 3 * 2/3) = 64
    hd = dim // num_heads

    keys = iter(jax.random.split(key, 64))

    def nrm(shape, std=0.05):
        return std * jax.random.normal(next(keys), shape, dtype=jnp.float32)

    raw = {"layers": []}
    for _ in range(num_layers):
        raw["layers"].append(dict(
            wq=nrm((dim, dim)), wk=nrm((dim, dim)), wv=nrm((dim, dim)),
            wo=nrm((dim, dim)),
            s_qk=(1.0 / math.sqrt(dim)) * (1.0 + nrm((num_heads, hd), 0.02)),
            wup=nrm((hidden, dim)), wgate=nrm((hidden, dim)), wdown=nrm((dim, hidden)),
            s_u=1.0 + nrm((1, hidden), 0.02),
            s_v=1.0 + nrm((1, hidden), 0.02),
            alpha_A=(1.0 / math.sqrt(dim)) * (1.0 + nrm((1, dim), 0.02)),
            alpha_M=(1.0 / math.sqrt(dim)) * (1.0 + nrm((1, dim), 0.02)),
        ))
    raw["w_out"] = nrm((dim, dim))
    raw["s_z"] = (1.0 / math.sqrt(dim)) * (1.0 + nrm((1, dim), 0.02))

    x = jax.random.normal(next(keys), (B, S, dim), dtype=jnp.float32)
    # key-padding mask (True = masked), matching mask.unsqueeze(1).unsqueeze(2) usage
    mask = jnp.arange(S)[None, :] >= jnp.array([S, 5])[:, None]

    # ---- f32 path: must match the reference tightly -------------------------
    layer_params, w_out_t = prepare_encoder_params(raw, dim=dim, num_heads=num_heads)
    encoder = jax.jit(ngpt_encoder_forward)
    logits, scaled = jax.block_until_ready(encoder(x, mask, layer_params, w_out_t))

    ref_logits, ref_scaled = ngpt_encoder_reference(x, mask, raw, dim=dim,
                                                    num_heads=num_heads)
    assert logits.shape == (B, S, dim) and scaled.shape == (B, S, dim)
    assert jnp.allclose(logits, ref_logits, atol=5e-4, rtol=1e-3), "logits mismatch"
    assert jnp.allclose(scaled, ref_scaled, atol=5e-4, rtol=1e-3), "scaled logits mismatch"

    # ---- bf16 MXU path (v6e/v7x): loose tolerance sanity check --------------
    layer_bf16, w_out_bf16 = prepare_encoder_params(raw, dim=dim, num_heads=num_heads,
                                                    compute_dtype=jnp.bfloat16)
    logits_bf, scaled_bf = jax.block_until_ready(
        jax.jit(ngpt_encoder_forward)(x, mask, layer_bf16, w_out_bf16))
    assert bool(jnp.all(jnp.isfinite(logits_bf.astype(jnp.float32))))
    assert float(jnp.max(jnp.abs(logits_bf.astype(jnp.float32) - ref_logits))) < 0.1, \
        "bf16 logits diverged"
    assert float(jnp.max(jnp.abs(scaled_bf.astype(jnp.float32) - ref_scaled))) < 0.1, \
        "bf16 scaled logits diverged"

    print("KERNEL_OK")
</pallas_src>

<mosaic_0001>
module attributes {stable_mosaic.version = 11 : i64} {
  func.func @_attn_kernel(%arg0: i32, %arg1: i32, %arg2: i32, %arg3: memref<1x8x32xf32, #tpu.memory_space<vmem>>, %arg4: memref<1x8x32xf32, #tpu.memory_space<vmem>>, %arg5: memref<1x32x8xf32, #tpu.memory_space<vmem>>, %arg6: memref<1x32x16xf32, #tpu.memory_space<vmem>>, %arg7: memref<1x1x8xf32, #tpu.memory_space<vmem>>, %arg8: memref<1x1x8xf32, #tpu.memory_space<vmem>>, %arg9: memref<1x1x8xi32, #tpu.memory_space<vmem>>, %arg10: memref<1x8x32xf32, #tpu.memory_space<vmem>>, %arg11: memref<1x32xf32, #tpu.memory_space<vmem>>, %arg12: memref<1x8x32xf32, #tpu.memory_space<vmem>>, %arg13: memref<8x32xf32, #tpu.memory_space<vmem>>) attributes {dimension_semantics = [#tpu.dimension_semantics<parallel>, #tpu.dimension_semantics<parallel>, #tpu.dimension_semantics<arbitrary>], iteration_bounds = array<i64: 2, 1, 4>, scalar_prefetch = 0 : i64, scratch_operands = 1 : i64, tpu.core_type = #tpu.core_type<tc>, window_params = [{transform_indices = @transform_0, window_bounds = array<i64: 1, 8, 32>}, {transform_indices = @transform_1, window_bounds = array<i64: 1, 8, 32>}, {transform_indices = @transform_2, window_bounds = array<i64: 1, 32, 8>}, {transform_indices = @transform_3, window_bounds = array<i64: 1, 32, 16>}, {transform_indices = @transform_4, window_bounds = array<i64: 1, 1, 8>}, {transform_indices = @transform_5, window_bounds = array<i64: 1, 1, 8>}, {transform_indices = @transform_6, window_bounds = array<i64: 1, 1, 8>}, {transform_indices = @transform_7, window_bounds = array<i64: 1, 8, 32>}, {pipeline_mode = #tpu.pipeline_mode<synchronous>, transform_indices = @transform_8, window_bounds = array<i64: 1, 32>}, {transform_indices = @transform_9, window_bounds = array<i64: 1, 8, 32>}]} {
    %c0_i32 = arith.constant 0 : i32
    %0 = arith.cmpi eq, %arg2, %c0_i32 : i32
    %1 = arith.extui %0 : i1 to i32
    %c0_i32_0 = arith.constant 0 : i32
    %2 = arith.cmpi ne, %1, %c0_i32_0 : i32
    scf.if %2 {
      %cst_41 = arith.constant 0.000000e+00 : f32
      %68 = vector.broadcast %cst_41 : f32 to vector<8x32xf32>
      %c0_42 = arith.constant 0 : index
      %c0_43 = arith.constant 0 : index
      %69 = vector.load %arg13[%c0_42, %c0_43] : memref<8x32xf32, #tpu.memory_space<vmem>>, vector<8x32xf32>
      tpu.vector_store %arg13[%c0_42, %c0_43], %68 {strides = array<i32>} : memref<8x32xf32, #tpu.memory_space<vmem>>, vector<8x32xf32>,
    } else {
    }
    %c0 = arith.constant 0 : index
    %c0_1 = arith.constant 0 : index
    %c0_2 = arith.constant 0 : index
    %3 = vector.load %arg3[%c0, %c0_1, %c0_2] : memref<1x8x32xf32, #tpu.memory_space<vmem>>, vector<1x8x32xf32>
    %4 = vector.shape_cast %3 : vector<1x8x32xf32> to vector<8x32xf32>
    %c0_3 = arith.constant 0 : index
    %c0_4 = arith.constant 0 : index
    %c0_5 = arith.constant 0 : index
    %5 = vector.load %arg4[%c0_3, %c0_4, %c0_5] : memref<1x8x32xf32, #tpu.memory_space<vmem>>, vector<1x8x32xf32>
    %6 = vector.shape_cast %5 : vector<1x8x32xf32> to vector<8x32xf32>
    %c0_6 = arith.constant 0 : index
    %c0_7 = arith.constant 0 : index
    %c0_8 = arith.constant 0 : index
    %7 = vector.load %arg5[%c0_6, %c0_7, %c0_8] : memref<1x32x8xf32, #tpu.memory_space<vmem>>, vector<1x32x8xf32>
    %8 = vector.shape_cast %7 : vector<1x32x8xf32> to vector<32x8xf32>
    %cst = arith.constant dense<0.000000e+00> : vector<8x8xf32>
    %9 = tpu.matmul %4, %8, %cst {dimension_numbers = #tpu.dot_dimension_numbers<[1], [0], [0], [1], [0, 0, 1, 1], [], []>} : vector<8x32xf32>, vector<32x8xf32>, vector<8x8xf32> -> vector<8x8xf32>
    %c0_9 = arith.constant 0 : index
    %c0_10 = arith.constant 0 : index
    %c0_11 = arith.constant 0 : index
    %10 = vector.load %arg6[%c0_9, %c0_10, %c0_11] : memref<1x32x16xf32, #tpu.memory_space<vmem>>, vector<1x32x16xf32>
    %11 = vector.shape_cast %10 : vector<1x32x16xf32> to vector<32x16xf32>
    %cst_12 = arith.constant dense<0.000000e+00> : vector<8x16xf32>
    %12 = tpu.matmul %6, %11, %cst_12 {dimension_numbers = #tpu.dot_dimension_numbers<[1], [0], [0], [1], [0, 0, 1, 1], [], []>} : vector<8x32xf32>, vector<32x16xf32>, vector<8x16xf32> -> vector<8x16xf32>
    %13 = vector.extract_strided_slice %12 {offsets = [0, 0], sizes = [8, 8], strides = [1, 1]} : vector<8x16xf32> to vector<8x8xf32>
    %14 = vector.extract_strided_slice %12 {offsets = [0, 8], sizes = [8, 8], strides = [1, 1]} : vector<8x16xf32> to vector<8x8xf32>
    %c0_13 = arith.constant 0 : index
    %c0_14 = arith.constant 0 : index
    %c0_15 = arith.constant 0 : index
    %15 = vector.load %arg7[%c0_13, %c0_14, %c0_15] : memref<1x1x8xf32, #tpu.memory_space<vmem>>, vector<1x1x8xf32>
    %16 = vector.shape_cast %15 : vector<1x1x8xf32> to vector<1x8xf32>
    %17 = arith.mulf %9, %9 : vector<8x8xf32>
    %cst_16 = arith.constant dense<0.000000e+00> : vector<8xf32>
    %18 = vector.multi_reduction <add>, %17, %cst_16 [1] : vector<8x8xf32> to vector<8xf32>
    %19 = vector.shape_cast %18 : vector<8xf32> to vector<8x1xf32>
    %cst_17 = arith.constant 9.99999996E-13 : f32
    %20 = vector.broadcast %cst_17 : f32 to vector<8x1xf32>
    %21 = arith.maximumf %19, %20 : vector<8x1xf32>
    %22 = math.rsqrt %21 : vector<8x1xf32>
    %23 = vector.broadcast %16 : vector<1x8xf32> to vector<8x8xf32>
    %24 = vector.broadcast %22 : vector<8x1xf32> to vector<8x8xf32>
    %25 = arith.mulf %23, %24 : vector<8x8xf32>
    %26 = arith.mulf %9, %25 : vector<8x8xf32>
    %c0_18 = arith.constant 0 : index
    %c0_19 = arith.constant 0 : index
    %c0_20 = arith.constant 0 : index
    %27 = vector.load %arg8[%c0_18, %c0_19, %c0_20] : memref<1x1x8xf32, #tpu.memory_space<vmem>>, vector<1x1x8xf32>
    %28 = vector.shape_cast %27 : vector<1x1x8xf32> to vector<1x8xf32>
    %29 = arith.mulf %13, %13 : vector<8x8xf32>
    %cst_21 = arith.constant dense<0.000000e+00> : vector<8xf32>
    %30 = vector.multi_reduction <add>, %29, %cst_21 [1] : vector<8x8xf32> to vector<8xf32>
    %31 = vector.shape_cast %30 : vector<8xf32> to vector<8x1xf32>
    %cst_22 = arith.constant 9.99999996E-13 : f32
    %32 = vector.broadcast %cst_22 : f32 to vector<8x1xf32>
    %33 = arith.maximumf %31, %32 : vector<8x1xf32>
    %34 = math.rsqrt %33 : vector<8x1xf32>
    %35 = vector.broadcast %28 : vector<1x8xf32> to vector<8x8xf32>
    %36 = vector.broadcast %34 : vector<8x1xf32> to vector<8x8xf32>
    %37 = arith.mulf %35, %36 : vector<8x8xf32>
    %38 = arith.mulf %13, %37 : vector<8x8xf32>
    %cst_23 = arith.constant dense<0.000000e+00> : vector<8x8xf32>
    %39 = tpu.matmul %26, %38, %cst_23 {dimension_numbers = #tpu.dot_dimension_numbers<[1], [1], [0], [0], [0, 0, 1, 0], [], []>} : vector<8x8xf32>, vector<8x8xf32>, vector<8x8xf32> -> vector<8x8xf32>
    %c0_24 = arith.constant 0 : index
    %c0_25 = arith.constant 0 : index
    %c0_26 = arith.constant 0 : index
    %40 = vector.load %arg9[%c0_24, %c0_25, %c0_26] : memref<1x1x8xi32, #tpu.memory_space<vmem>>, vector<1x1x8xi32>
    %41 = vector.shape_cast %40 : vector<1x1x8xi32> to vector<1x8xi32>
    %c0_i32_27 = arith.constant 0 : i32
    %42 = vector.broadcast %c0_i32_27 : i32 to vector<1x8xi32>
    %43 = arith.cmpi ne, %41, %42 : vector<1x8xi32>
    %cst_28 = arith.constant -1.000000e+09 : f32
    %44 = vector.shape_cast %43 : vector<1x8xi1> to vector<1x8xi1>
    %45 = vector.broadcast %44 : vector<1x8xi1> to vector<8x8xi1>
    %46 = vector.broadcast %cst_28 : f32 to vector<8x8xf32>
    %47 = arith.select %45, %46, %39 : vector<8x8xi1>, vector<8x8xf32>
    %cst_29 = arith.constant dense<0xFF800000> : vector<8xf32>
    %48 = vector.multi_reduction <maximumf>, %47, %cst_29 [1] : vector<8x8xf32> to vector<8xf32>
    %49 = vector.shape_cast %48 : vector<8xf32> to vector<8x1xf32>
    %50 = vector.broadcast %49 : vector<8x1xf32> to vector<8x8xf32>
    %51 = arith.subf %47, %50 : vector<8x8xf32>
    %52 = math.exp %51 : vector<8x8xf32>
    %cst_30 = arith.constant dense<0.000000e+00> : vector<8xf32>
    %53 = vector.multi_reduction <add>, %52, %cst_30 [1] : vector<8x8xf32> to vector<8xf32>
    %54 = vector.shape_cast %53 : vector<8xf32> to vector<8x1xf32>
    %55 = tpu.reciprocal %54 : vector<8x1xf32> -> vector<8x1xf32>
    %56 = vector.broadcast %55 : vector<8x1xf32> to vector<8x8xf32>
    %57 = arith.mulf %52, %56 : vector<8x8xf32>
    %cst_31 = arith.constant dense<0.000000e+00> : vector<8x8xf32>
    %58 = tpu.matmul %57, %14, %cst_31 {dimension_numbers = #tpu.dot_dimension_numbers<[1], [0], [0], [1], [0, 0, 1, 1], [], []>} : vector<8x8xf32>, vector<8x8xf32>, vector<8x8xf32> -> vector<8x8xf32>
    %c0_32 = arith.constant 0 : index
    %c0_33 = arith.constant 0 : index
    %59 = vector.load %arg13[%c0_32, %c0_33] : memref<8x32xf32, #tpu.memory_space<vmem>>, vector<8x32xf32>
    %c0_34 = arith.constant 0 : index
    %c0_35 = arith.constant 0 : index
    %c0_36 = arith.constant 0 : index
    %60 = vector.load %arg10[%c0_34, %c0_35, %c0_36] : memref<1x8x32xf32, #tpu.memory_space<vmem>>, vector<1x8x32xf32>
    %61 = vector.shape_cast %60 : vector<1x8x32xf32> to vector<8x32xf32>
    %cst_37 = arith.constant dense<0.000000e+00> : vector<8x32xf32>
    %62 = tpu.matmul %58, %61, %cst_37 {dimension_numbers = #tpu.dot_dimension_numbers<[1], [0], [0], [1], [0, 0, 1, 1], [], []>} : vector<8x8xf32>, vector<8x32xf32>, vector<8x32xf32> -> vector<8x32xf32>
    %63 = arith.addf %59, %62 : vector<8x32xf32>
    %c0_38 = arith.constant 0 : index
    %c0_39 = arith.constant 0 : index
    %64 = vector.load %arg13[%c0_38, %c0_39] : memref<8x32xf32, #tpu.memory_space<vmem>>, vector<8x32xf32>
    tpu.vector_store %arg13[%c0_38, %c0_39], %63 {strides = array<i32>} : memref<8x32xf32, #tpu.memory_space<vmem>>, vector<8x32xf32>,
    %c3_i32 = arith.constant 3 : i32
    %65 = arith.cmpi eq, %arg2, %c3_i32 : i32
    %66 = arith.extui %65 : i1 to i32
    %c0_i32_40 = arith.constant 0 : i32
    %67 = arith.cmpi ne, %66, %c0_i32_40 : i32
    scf.if %67 {
      %c0_41 = arith.constant 0 : index
      %c0_42 = arith.constant 0 : index
      %68 = vector.load %arg13[%c0_41, %c0_42] : memref<8x32xf32, #tpu.memory_space<vmem>>, vector<8x32xf32>
      %69 = arith.mulf %68, %68 : vector<8x32xf32>
      %cst_43 = arith.constant dense<0.000000e+00> : vector<8xf32>
      %70 = vector.multi_reduction <add>, %69, %cst_43 [1] : vector<8x32xf32> to vector<8xf32>
      %71 = vector.shape_cast %70 : vector<8xf32> to vector<8x1xf32>
      %cst_44 = arith.constant 9.99999996E-13 : f32
      %72 = vector.broadcast %cst_44 : f32 to vector<8x1xf32>
      %73 = arith.maximumf %71, %72 : vector<8x1xf32>
      %74 = math.rsqrt %73 : vector<8x1xf32>
      %75 = vector.broadcast %74 : vector<8x1xf32> to vector<8x32xf32>
      %76 = arith.mulf %68, %75 : vector<8x32xf32>
      %c0_45 = arith.constant 0 : index
      %c0_46 = arith.constant 0 : index
      %77 = vector.load %arg11[%c0_45, %c0_46] : memref<1x32xf32, #tpu.memory_space<vmem>>, vector<1x32xf32>
      %78 = arith.subf %76, %4 : vector<8x32xf32>
      %79 = vector.broadcast %77 : vector<1x32xf32> to vector<8x32xf32>
      %80 = arith.mulf %79, %78 : vector<8x32xf32>
      %81 = arith.addf %4, %80 : vector<8x32xf32>
      %82 = arith.mulf %81, %81 : vector<8x32xf32>
      %cst_47 = arith.constant dense<0.000000e+00> : vector<8xf32>
      %83 = vector.multi_reduction <add>, %82, %cst_47 [1] : vector<8x32xf32> to vector<8xf32>
      %84 = vector.shape_cast %83 : vector<8xf32> to vector<8x1xf32>
      %cst_48 = arith.constant 9.99999996E-13 : f32
      %85 = vector.broadcast %cst_48 : f32 to vector<8x1xf32>
      %86 = arith.maximumf %84, %85 : vector<8x1xf32>
      %87 = math.rsqrt %86 : vector<8x1xf32>
      %88 = vector.broadcast %87 : vector<8x1xf32> to vector<8x32xf32>
      %89 = arith.mulf %81, %88 : vector<8x32xf32>
      %c0_49 = arith.constant 0 : index
      %c0_50 = arith.constant 0 : index
      %c0_51 = arith.constant 0 : index
      %90 = vector.load %arg12[%c0_49, %c0_50, %c0_51] : memref<1x8x32xf32, #tpu.memory_space<vmem>>, vector<1x8x32xf32>
      %91 = vector.shape_cast %90 : vector<1x8x32xf32> to vector<8x32xf32>
      %92 = vector.shape_cast %89 : vector<8x32xf32> to vector<1x8x32xf32>
      tpu.vector_store %arg12[%c0_49, %c0_50, %c0_51], %92 {strides = array<i32>} : memref<1x8x32xf32, #tpu.memory_space<vmem>>, vector<1x8x32xf32>,
    } else {
    }
    return
  }
  func.func @transform_0(%arg0: i32, %arg1: i32, %arg2: i32) -> (i32, i32, i32) {
    %c0_i32 = arith.constant 0 : i32
    %c0_i32_0 = arith.constant 0 : i32
    return %arg0, %arg1, %c0_i32 : i32, i32, i32
  }
  func.func @transform_1(%arg0: i32, %arg1: i32, %arg2: i32) -> (i32, i32, i32) {
    %c0_i32 = arith.constant 0 : i32
    %c0_i32_0 = arith.constant 0 : i32
    %c0_i32_1 = arith.constant 0 : i32
    return %arg0, %c0_i32, %c0_i32_0 : i32, i32, i32
  }
  func.func @transform_2(%arg0: i32, %arg1: i32, %arg2: i32) -> (i32, i32, i32) {
    %c0_i32 = arith.constant 0 : i32
    %c0_i32_0 = arith.constant 0 : i32
    %c0_i32_1 = arith.constant 0 : i32
    return %arg2, %c0_i32, %c0_i32_0 : i32, i32, i32
  }
  func.func @transform_3(%arg0: i32, %arg1: i32, %arg2: i32) -> (i32, i32, i32) {
    %c0_i32 = arith.constant 0 : i32
    %c0_i32_0 = arith.constant 0 : i32
    %c0_i32_1 = arith.constant 0 : i32
    return %arg2, %c0_i32, %c0_i32_0 : i32, i32, i32
  }
  func.func @transform_4(%arg0: i32, %arg1: i32, %arg2: i32) -> (i32, i32, i32) {
    %c0_i32 = arith.constant 0 : i32
    %c0_i32_0 = arith.constant 0 : i32
    %c0_i32_1 = arith.constant 0 : i32
    return %arg2, %c0_i32, %c0_i32_0 : i32, i32, i32
  }
  func.func @transform_5(%arg0: i32, %arg1: i32, %arg2: i32) -> (i32, i32, i32) {
    %c0_i32 = arith.constant 0 : i32
    %c0_i32_0 = arith.constant 0 : i32
    %c0_i32_1 = arith.constant 0 : i32
    return %arg2, %c0_i32, %c0_i32_0 : i32, i32, i32
  }
  func.func @transform_6(%arg0: i32, %arg1: i32, %arg2: i32) -> (i32, i32, i32) {
    %c0_i32 = arith.constant 0 : i32
    %c0_i32_0 = arith.constant 0 : i32
    %c0_i32_1 = arith.constant 0 : i32
    return %arg0, %c0_i32, %c0_i32_0 : i32, i32, i32
  }
  func.func @transform_7(%arg0: i32, %arg1: i32, %arg2: i32) -> (i32, i32, i32) {
    %c0_i32 = arith.constant 0 : i32
    %c0_i32_0 = arith.constant 0 : i32
    %c0_i32_1 = arith.constant 0 : i32
    return %arg2, %c0_i32, %c0_i32_0 : i32, i32, i32
  }
  func.func @transform_8(%arg0: i32, %arg1: i32, %arg2: i32) -> (i32, i32) {
    %c0_i32 = arith.constant 0 : i32
    %c0_i32_0 = arith.constant 0 : i32
    %c0_i32_1 = arith.constant 0 : i32
    return %c0_i32, %c0_i32_0 : i32, i32
  }
  func.func @transform_9(%arg0: i32, %arg1: i32, %arg2: i32) -> (i32, i32, i32) {
    %c0_i32 = arith.constant 0 : i32
    %c0_i32_0 = arith.constant 0 : i32
    return %arg0, %arg1, %c0_i32 : i32, i32, i32
  }
}

module attributes {stable_mosaic.version = 11 : i64} {
  func.func @_mlp_kernel(%arg0: i32, %arg1: i32, %arg2: i32, %arg3: memref<1x8x32xf32, #tpu.memory_space<vmem>>, %arg4: memref<32x64xf32, #tpu.memory_space<vmem>>, %arg5: memref<32x64xf32, #tpu.memory_space<vmem>>, %arg6: memref<64x32xf32, #tpu.memory_space<vmem>>, %arg7: memref<1x32xf32, #tpu.memory_space<vmem>>, %arg8: memref<1x8x32xf32, #tpu.memory_space<vmem>>) attributes {dimension_semantics = [#tpu.dimension_semantics<parallel>, #tpu.dimension_semantics<parallel>, #tpu.dimension_semantics<arbitrary>], iteration_bounds = array<i64: 2, 1, 1>, scalar_prefetch = 0 : i64, scratch_operands = 0 : i64, tpu.core_type = #tpu.core_type<tc>, window_params = [{transform_indices = @transform_0, window_bounds = array<i64: 1, 8, 32>}, {transform_indices = @transform_1, window_bounds = array<i64: 32, 64>}, {transform_indices = @transform_2, window_bounds = array<i64: 32, 64>}, {transform_indices = @transform_3, window_bounds = array<i64: 64, 32>}, {pipeline_mode = #tpu.pipeline_mode<synchronous>, transform_indices = @transform_4, window_bounds = array<i64: 1, 32>}, {transform_indices = @transform_5, window_bounds = array<i64: 1, 8, 32>}]} {
    %c0 = arith.constant 0 : index
    %c0_0 = arith.constant 0 : index
    %c0_1 = arith.constant 0 : index
    %0 = vector.load %arg3[%c0, %c0_0, %c0_1] : memref<1x8x32xf32, #tpu.memory_space<vmem>>, vector<1x8x32xf32>
    %1 = vector.shape_cast %0 : vector<1x8x32xf32> to vector<8x32xf32>
    %c0_2 = arith.constant 0 : index
    %c0_3 = arith.constant 0 : index
    %2 = vector.load %arg4[%c0_2, %c0_3] : memref<32x64xf32, #tpu.memory_space<vmem>>, vector<32x64xf32>
    %cst = arith.constant dense<0.000000e+00> : vector<8x64xf32>
    %3 = tpu.matmul %1, %2, %cst {dimension_numbers = #tpu.dot_dimension_numbers<[1], [0], [0], [1], [0, 0, 1, 1], [], []>} : vector<8x32xf32>, vector<32x64xf32>, vector<8x64xf32> -> vector<8x64xf32>
    %c0_4 = arith.constant 0 : index
    %c0_5 = arith.constant 0 : index
    %4 = vector.load %arg5[%c0_4, %c0_5] : memref<32x64xf32, #tpu.memory_space<vmem>>, vector<32x64xf32>
    %cst_6 = arith.constant dense<0.000000e+00> : vector<8x64xf32>
    %5 = tpu.matmul %1, %4, %cst_6 {dimension_numbers = #tpu.dot_dimension_numbers<[1], [0], [0], [1], [0, 0, 1, 1], [], []>} : vector<8x32xf32>, vector<32x64xf32>, vector<8x64xf32> -> vector<8x64xf32>
    %6 = arith.negf %5 : vector<8x64xf32>
    %7 = math.exp %6 : vector<8x64xf32>
    %cst_7 = arith.constant 1.000000e+00 : f32
    %8 = vector.broadcast %cst_7 : f32 to vector<8x64xf32>
    %9 = arith.addf %8, %7 : vector<8x64xf32>
    %10 = arith.divf %8, %9 : vector<8x64xf32>
    %11 = arith.mulf %5, %10 : vector<8x64xf32>
    %12 = arith.mulf %3, %11 : vector<8x64xf32>
    %c0_8 = arith.constant 0 : index
    %c0_9 = arith.constant 0 : index
    %13 = vector.load %arg6[%c0_8, %c0_9] : memref<64x32xf32, #tpu.memory_space<vmem>>, vector<64x32xf32>
    %cst_10 = arith.constant dense<0.000000e+00> : vector<8x32xf32>
    %14 = tpu.matmul %12, %13, %cst_10 {dimension_numbers = #tpu.dot_dimension_numbers<[1], [0], [0], [1], [0, 0, 1, 1], [], []>} : vector<8x64xf32>, vector<64x32xf32>, vector<8x32xf32> -> vector<8x32xf32>
    %15 = arith.mulf %14, %14 : vector<8x32xf32>
    %cst_11 = arith.constant dense<0.000000e+00> : vector<8xf32>
    %16 = vector.multi_reduction <add>, %15, %cst_11 [1] : vector<8x32xf32> to vector<8xf32>
    %17 = vector.shape_cast %16 : vector<8xf32> to vector<8x1xf32>
    %cst_12 = arith.constant 9.99999996E-13 : f32
    %18 = vector.broadcast %cst_12 : f32 to vector<8x1xf32>
    %19 = arith.maximumf %17, %18 : vector<8x1xf32>
    %20 = math.rsqrt %19 : vector<8x1xf32>
    %21 = vector.broadcast %20 : vector<8x1xf32> to vector<8x32xf32>
    %22 = arith.mulf %14, %21 : vector<8x32xf32>
    %c0_13 = arith.constant 0 : index
    %c0_14 = arith.constant 0 : index
    %23 = vector.load %arg7[%c0_13, %c0_14] : memref<1x32xf32, #tpu.memory_space<vmem>>, vector<1x32xf32>
    %24 = arith.subf %22, %1 : vector<8x32xf32>
    %25 = vector.broadcast %23 : vector<1x32xf32> to vector<8x32xf32>
    %26 = arith.mulf %25, %24 : vector<8x32xf32>
    %27 = arith.addf %1, %26 : vector<8x32xf32>
    %28 = arith.mulf %27, %27 : vector<8x32xf32>
    %cst_15 = arith.constant dense<0.000000e+00> : vector<8xf32>
    %29 = vector.multi_reduction <add>, %28, %cst_15 [1] : vector<8x32xf32> to vector<8xf32>
    %30 = vector.shape_cast %29 : vector<8xf32> to vector<8x1xf32>
    %cst_16 = arith.constant 9.99999996E-13 : f32
    %31 = vector.broadcast %cst_16 : f32 to vector<8x1xf32>
    %32 = arith.maximumf %30, %31 : vector<8x1xf32>
    %33 = math.rsqrt %32 : vector<8x1xf32>
    %34 = vector.broadcast %33 : vector<8x1xf32> to vector<8x32xf32>
    %35 = arith.mulf %27, %34 : vector<8x32xf32>
    %c0_17 = arith.constant 0 : index
    %c0_18 = arith.constant 0 : index
    %c0_19 = arith.constant 0 : index
    %36 = vector.load %arg8[%c0_17, %c0_18, %c0_19] : memref<1x8x32xf32, #tpu.memory_space<vmem>>, vector<1x8x32xf32>
    %37 = vector.shape_cast %36 : vector<1x8x32xf32> to vector<8x32xf32>
    %38 = vector.shape_cast %35 : vector<8x32xf32> to vector<1x8x32xf32>
    tpu.vector_store %arg8[%c0_17, %c0_18, %c0_19], %38 {strides = array<i32>} : memref<1x8x32xf32, #tpu.memory_space<vmem>>, vector<1x8x32xf32>,
    return
  }
  func.func @transform_0(%arg0: i32, %arg1: i32, %arg2: i32) -> (i32, i32, i32) {
    %c0_i32 = arith.constant 0 : i32
    %c0_i32_0 = arith.constant 0 : i32
    return %arg0, %arg1, %c0_i32 : i32, i32, i32
  }
  func.func @transform_1(%arg0: i32, %arg1: i32, %arg2: i32) -> (i32, i32) {
    %c0_i32 = arith.constant 0 : i32
    %c0_i32_0 = arith.constant 0 : i32
    return %c0_i32, %arg2 : i32, i32
  }
  func.func @transform_2(%arg0: i32, %arg1: i32, %arg2: i32) -> (i32, i32) {
    %c0_i32 = arith.constant 0 : i32
    %c0_i32_0 = arith.constant 0 : i32
    return %c0_i32, %arg2 : i32, i32
  }
  func.func @transform_3(%arg0: i32, %arg1: i32, %arg2: i32) -> (i32, i32) {
    %c0_i32 = arith.constant 0 : i32
    %c0_i32_0 = arith.constant 0 : i32
    return %arg2, %c0_i32 : i32, i32
  }
  func.func @transform_4(%arg0: i32, %arg1: i32, %arg2: i32) -> (i32, i32) {
    %c0_i32 = arith.constant 0 : i32
    %c0_i32_0 = arith.constant 0 : i32
    %c0_i32_1 = arith.constant 0 : i32
    return %c0_i32, %c0_i32_0 : i32, i32
  }
  func.func @transform_5(%arg0: i32, %arg1: i32, %arg2: i32) -> (i32, i32, i32) {
    %c0_i32 = arith.constant 0 : i32
    %c0_i32_0 = arith.constant 0 : i32
    return %arg0, %arg1, %c0_i32 : i32, i32, i32
  }
}

module attributes {stable_mosaic.version = 11 : i64} {
  func.func @_matmul_kernel(%arg0: i32, %arg1: i32, %arg2: memref<1x8x32xf32, #tpu.memory_space<vmem>>, %arg3: memref<32x32xf32, #tpu.memory_space<vmem>>, %arg4: memref<1x8x32xf32, #tpu.memory_space<vmem>>) attributes {dimension_semantics = [#tpu.dimension_semantics<parallel>, #tpu.dimension_semantics<parallel>], iteration_bounds = array<i64: 2, 1>, scalar_prefetch = 0 : i64, scratch_operands = 0 : i64, tpu.core_type = #tpu.core_type<tc>, window_params = [{transform_indices = @transform_0, window_bounds = array<i64: 1, 8, 32>}, {pipeline_mode = #tpu.pipeline_mode<synchronous>, transform_indices = @transform_1, window_bounds = array<i64: 32, 32>}, {transform_indices = @transform_2, window_bounds = array<i64: 1, 8, 32>}]} {
    %c0 = arith.constant 0 : index
    %c0_0 = arith.constant 0 : index
    %c0_1 = arith.constant 0 : index
    %0 = vector.load %arg2[%c0, %c0_0, %c0_1] : memref<1x8x32xf32, #tpu.memory_space<vmem>>, vector<1x8x32xf32>
    %1 = vector.shape_cast %0 : vector<1x8x32xf32> to vector<8x32xf32>
    %c0_2 = arith.constant 0 : index
    %c0_3 = arith.constant 0 : index
    %2 = vector.load %arg3[%c0_2, %c0_3] : memref<32x32xf32, #tpu.memory_space<vmem>>, vector<32x32xf32>
    %cst = arith.constant dense<0.000000e+00> : vector<8x32xf32>
    %3 = tpu.matmul %1, %2, %cst {dimension_numbers = #tpu.dot_dimension_numbers<[1], [0], [0], [1], [0, 0, 1, 1], [], []>} : vector<8x32xf32>, vector<32x32xf32>, vector<8x32xf32> -> vector<8x32xf32>
    %c0_4 = arith.constant 0 : index
    %c0_5 = arith.constant 0 : index
    %c0_6 = arith.constant 0 : index
    %4 = vector.load %arg4[%c0_4, %c0_5, %c0_6] : memref<1x8x32xf32, #tpu.memory_space<vmem>>, vector<1x8x32xf32>
    %5 = vector.shape_cast %4 : vector<1x8x32xf32> to vector<8x32xf32>
    %6 = vector.shape_cast %3 : vector<8x32xf32> to vector<1x8x32xf32>
    tpu.vector_store %arg4[%c0_4, %c0_5, %c0_6], %6 {strides = array<i32>} : memref<1x8x32xf32, #tpu.memory_space<vmem>>, vector<1x8x32xf32>,
    return
  }
  func.func @transform_0(%arg0: i32, %arg1: i32) -> (i32, i32, i32) {
    %c0_i32 = arith.constant 0 : i32
    %c0_i32_0 = arith.constant 0 : i32
    return %arg0, %arg1, %c0_i32 : i32, i32, i32
  }
  func.func @transform_1(%arg0: i32, %arg1: i32) -> (i32, i32) {
    %c0_i32 = arith.constant 0 : i32
    %c0_i32_0 = arith.constant 0 : i32
    %c0_i32_1 = arith.constant 0 : i32
    return %c0_i32, %c0_i32_0 : i32, i32
  }
  func.func @transform_2(%arg0: i32, %arg1: i32) -> (i32, i32, i32) {
    %c0_i32 = arith.constant 0 : i32
    %c0_i32_0 = arith.constant 0 : i32
    return %arg0, %arg1, %c0_i32 : i32, i32, i32
  }
}

</mosaic_0001>

<llo_original>
// kernel: ngpt_encoder_forward.6
$region0: #{ngpt_encoder_forward.6}
  #allocation0 [shape = 'u32[]', space=smem, size = 0x4, offset = 0x4, fixed_abs, tag = 'smem constant byte address 0x4 - core index']
  #allocation1 [shape = 'u32[144,128]{1,0:T(1,128)}', space=vmem, size = 0x12000, scoped, tag = 'internal scratch']
  %s0 = inlined_call_operand.vmem [shape: f32[2,8,32], index: 0, kind: input, shape index: {}]
  %s1 = inlined_call_operand.vmem [shape: f32[32,64], index: 1, kind: input, shape index: {}]
  %s2 = inlined_call_operand.vmem [shape: f32[32,64], index: 2, kind: input, shape index: {}]
  %s3 = inlined_call_operand.vmem [shape: f32[64,32], index: 3, kind: input, shape index: {}]
  %s4 = inlined_call_operand.vmem [shape: f32[1,32], index: 4, kind: input, shape index: {}]
  %s5 = inlined_call_operand.vmem [shape: f32[2,8,32], index: 5, kind: output, shape index: {}]
  %s6 = sld [smem:[#allocation0]]
  $region53: #{ngpt_encoder_forward.6} parent=0
    _
  %s8 = ssub.s32 1, %s6
  %s9 = scalar_select 0, %s8, %s6
  loop: start=0, step=1, limit=4
  $region2: #{ngpt_encoder_forward.6} parent=0 // loop_pre_header
    _
  $region3: #{ngpt_encoder_forward.6} parent=0 // loop_header
    %s11 = sphi 0, %s15
    %p12 = scmp.ge.s32.totalorder %s11, 4
    %s18 = sphi 0, %s37
    %s19 = sphi 0, %s33
    %s20 = sphi 0, %s29
    %s21 = sphi 0, %s18
    %s22 = sphi 0, %s19
    %s23 = sphi 0, %s20
    %s24 = sphi 0, %s21
    %s25 = sphi 0, %s22
    %s26 = sphi 0, %s23
    %s42 = sphi 0, %s44
    %s45 = sphi 0, %s42
    %s46 = sphi 0, %s45
    %s62 = sphi 0, %s46
    %s68 = sphi 0, %s70
    %s71 = sphi 0, %s68
    %s72 = sphi 0, %s71
    %s88 = sphi 0, %s72
    %s94 = sphi 0, %s96
    %s97 = sphi 0, %s94
    %s98 = sphi 0, %s97
    %s114 = sphi 0, %s98
    %s120 = sphi 0, %s122
    %s123 = sphi 0, %s120
    %s124 = sphi 0, %s123
    %s140 = sphi 0, %s124
    %s144 = sphi 0, %s144
    %s146 = sphi 0, %s144
    %s147 = sphi 0, %s146
    %s161 = sphi 0, %s147
    %s169 = sphi 0, %s171
    %s172 = sphi 0, %s169
    %s173 = sphi 0, %s172
    %s189 = sphi 0, %s173
  $region4: #{ngpt_encoder_forward.6} parent=0 // loop_header_branch
    %14 = sbr.rel (%p12) target = $region8
  $region5: #{ngpt_encoder_forward.6} parent=0 // loop_body
    %s16 = ssub.s32 %s11, 1
    %s17 = ssub.s32 %s11, 2
    %s27 = sadd.s32 1, %s20
    %p28 = scmp.ge.s32.totalorder %s27, 1
    %s29 = scalar_select %p28, 0, %s27
    %s30 = sadd.s32 1, %s19
    %s31 = scalar_select %p28, %s30, %s19
    %p32 = scmp.ge.s32.totalorder %s31, 1
    %s33 = scalar_select %p32, 0, %s31
    %s34 = sadd.s32 1, %s18
    %s35 = scalar_select %p32, %s34, %s18
    %p36 = scmp.ge.s32.totalorder %s35, 2
    %s37 = scalar_select %p36, 0, %s35
    %s38 = ssub.s32 %s18, %s37
    %s39 = ssub.s32 %s19, %s33
    %s40 = sor.u32 %s38, %s39
    %p41 = scmp.eq.s32.totalorder %s40, 0
    %s43 = sadd.s32 %s42, 1
    %s44 = scalar_select %p41, %s42, %s43
    %p47 = pneg %p41
    %p48 = scmp.eq.s32.totalorder %s11, 1
    %p49 = por %p47, %p48
    %p50 = scmp.ne.s32.totalorder %s42, %s45
    %p51 = scmp.eq.s32.totalorder %s11, 0
    %p52 = por %p50, %p51
    %p53 = scmp.ne.s32.totalorder %s42, %s45
    %p54 = scmp.eq.s32.totalorder %s16, 1
    %p55 = por %p53, %p54
    %p56 = scmp.ne.s32.totalorder %s45, %s46
    %p57 = scmp.eq.s32.totalorder %s16, 0
    %p58 = por %p56, %p57
    %p59 = scmp.ne.s32.totalorder %s45, %s46
    %p60 = scmp.eq.s32.totalorder %s17, 1
    %p61 = por %p59, %p60
    %p63 = scmp.ne.s32.totalorder %s46, %s62
    %p64 = scmp.eq.s32.totalorder %s17, 0
    %p65 = por %p63, %p64
    %s66 = ssub.s32 %s20, %s29
    %p67 = scmp.eq.s32.totalorder %s66, 0
    %s69 = sadd.s32 %s68, 1
    %s70 = scalar_select %p67, %s68, %s69
    %p73 = pneg %p67
    %p74 = scmp.eq.s32.totalorder %s11, 1
    %p75 = por %p73, %p74
    %p76 = scmp.ne.s32.totalorder %s68, %s71
    %p77 = scmp.eq.s32.totalorder %s11, 0
    %p78 = por %p76, %p77
    %p79 = scmp.ne.s32.totalorder %s68, %s71
    %p80 = scmp.eq.s32.totalorder %s16, 1
    %p81 = por %p79, %p80
    %p82 = scmp.ne.s32.totalorder %s71, %s72
    %p83 = scmp.eq.s32.totalorder %s16, 0
    %p84 = por %p82, %p83
    %p85 = scmp.ne.s32.totalorder %s71, %s72
    %p86 = scmp.eq.s32.totalorder %s17, 1
    %p87 = por %p85, %p86
    %p89 = scmp.ne.s32.totalorder %s72, %s88
    %p90 = scmp.eq.s32.totalorder %s17, 0
    %p91 = por %p89, %p90
    %s92 = ssub.s32 %s20, %s29
    %p93 = scmp.eq.s32.totalorder %s92, 0
    %s95 = sadd.s32 %s94, 1
    %s96 = scalar_select %p93, %s94, %s95
    %p99 = pneg %p93
    %p100 = scmp.eq.s32.totalorder %s11, 1
    %p101 = por %p99, %p100
    %p102 = scmp.ne.s32.totalorder %s94, %s97
    %p103 = scmp.eq.s32.totalorder %s11, 0
    %p104 = por %p102, %p103
    %p105 = scmp.ne.s32.totalorder %s94, %s97
    %p106 = scmp.eq.s32.totalorder %s16, 1
    %p107 = por %p105, %p106
    %p108 = scmp.ne.s32.totalorder %s97, %s98
    %p109 = scmp.eq.s32.totalorder %s16, 0
    %p110 = por %p108, %p109
    %p111 = scmp.ne.s32.totalorder %s97, %s98
    %p112 = scmp.eq.s32.totalorder %s17, 1
    %p113 = por %p111, %p112
    %p115 = scmp.ne.s32.totalorder %s98, %s114
    %p116 = scmp.eq.s32.totalorder %s17, 0
    %p117 = por %p115, %p116
    %s118 = ssub.s32 %s20, %s29
    %p119 = scmp.eq.s32.totalorder %s118, 0
    %s121 = sadd.s32 %s120, 1
    %s122 = scalar_select %p119, %s120, %s121
    %p125 = pneg %p119
    %p126 = scmp.eq.s32.totalorder %s11, 1
    %p127 = por %p125, %p126
    %p128 = scmp.ne.s32.totalorder %s120, %s123
    %p129 = scmp.eq.s32.totalorder %s11, 0
    %p130 = por %p128, %p129
    %p131 = scmp.ne.s32.totalorder %s120, %s123
    %p132 = scmp.eq.s32.totalorder %s16, 1
    %p133 = por %p131, %p132
    %p134 = scmp.ne.s32.totalorder %s123, %s124
    %p135 = scmp.eq.s32.totalorder %s16, 0
    %p136 = por %p134, %p135
    %p137 = scmp.ne.s32.totalorder %s123, %s124
    %p138 = scmp.eq.s32.totalorder %s17, 1
    %p139 = por %p137, %p138
    %p141 = scmp.ne.s32.totalorder %s124, %s140
    %p142 = scmp.eq.s32.totalorder %s17, 0
    %p143 = por %p141, %p142
    %s145 = sadd.s32 %s144, 1
    %p148 = scmp.eq.s32.totalorder %s11, 1
    %p149 = scmp.ne.s32.totalorder %s144, %s146
    %p150 = scmp.eq.s32.totalorder %s11, 0
    %p151 = por %p149, %p150
    %p152 = scmp.ne.s32.totalorder %s144, %s146
    %p153 = scmp.eq.s32.totalorder %s16, 1
    %p154 = por %p152, %p153
    %p155 = scmp.ne.s32.totalorder %s146, %s147
    %p156 = scmp.eq.s32.totalorder %s16, 0
    %p157 = por %p155, %p156
    %p158 = scmp.ne.s32.totalorder %s146, %s147
    %p159 = scmp.eq.s32.totalorder %s17, 1
    %p160 = por %p158, %p159
    %p162 = scmp.ne.s32.totalorder %s147, %s161
    %p163 = scmp.eq.s32.totalorder %s17, 0
    %p164 = por %p162, %p163
    %s165 = ssub.s32 %s18, %s37
    %s166 = ssub.s32 %s19, %s33
    %s167 = sor.u32 %s165, %s166
    %p168 = scmp.eq.s32.totalorder %s167, 0
    %s170 = sadd.s32 %s169, 1
    %s171 = scalar_select %p168, %s169, %s170
    %p174 = pneg %p168
    %p175 = scmp.eq.s32.totalorder %s11, 1
    %p176 = por %p174, %p175
    %p177 = scmp.ne.s32.totalorder %s169, %s172
    %p178 = scmp.eq.s32.totalorder %s11, 0
    %p179 = por %p177, %p178
    %p180 = scmp.ne.s32.totalorder %s169, %s172
    %p181 = scmp.eq.s32.totalorder %s16, 1
    %p182 = por %p180, %p181
    %p183 = scmp.ne.s32.totalorder %s172, %s173
    %p184 = scmp.eq.s32.totalorder %s16, 0
    %p185 = por %p183, %p184
    %p186 = scmp.ne.s32.totalorder %s172, %s173
    %p187 = scmp.eq.s32.totalorder %s17, 1
    %p188 = por %p186, %p187
    %p190 = scmp.ne.s32.totalorder %s173, %s189
    %p191 = scmp.eq.s32.totalorder %s17, 0
    %p192 = por %p190, %p191
    %p193 = scmp.le.s32.totalorder 1, %s11
    %p194 = scmp.lt.s32.totalorder %s11, 3
    %p195 = pnand %p193, %p194
    %p196 = pneg %p195
    // Predicated region
    $region9: #{ngpt_encoder_forward.6} parent=5 // pred_check
      _
    $region10: #{ngpt_encoder_forward.6} parent=5 // pred_check_branch
      %198 = sbr.rel (%p195) target = $region12
    $region11: #{ngpt_encoder_forward.6} parent=5 // pred_region
      %s199 = ssub.s32 %s11, 1
      // Predicated region
      $region13: #{ngpt_encoder_forward.6} parent=11 // pred_check
        %p200 = pneg %p84
      $region14: #{ngpt_encoder_forward.6} parent=11 // pred_check_branch
        %202 = sbr.rel (%p200) target = $region16
      $region15: #{ngpt_encoder_forward.6} parent=11 // pred_region
        %p203 = scmp.lt.s32.totalorder %s23, 0
        %s204 = scalar_select %p203, %s23, 0
        %s205 = smul.addr %s204, 8
        %s206 = scalar_lea.vmem %s1, %s205
      $region16: #{ngpt_encoder_forward.6} parent=11 // pred_fallthru
        _
      // Predicated region
      $region17: #{ngpt_encoder_forward.6} parent=11 // pred_check
        %p207 = pneg %p110
      $region18: #{ngpt_encoder_forward.6} parent=11 // pred_check_branch
        %209 = sbr.rel (%p207) target = $region20
      $region19: #{ngpt_encoder_forward.6} parent=11 // pred_region
        %p210 = scmp.lt.s32.totalorder %s23, 0
        %s211 = scalar_select %p210, %s23, 0
        %s212 = smul.addr %s211, 8
        %s213 = scalar_lea.vmem %s2, %s212
      $region20: #{ngpt_encoder_forward.6} parent=11 // pred_fallthru
        _
      // Predicated region
      $region21: #{ngpt_encoder_forward.6} parent=11 // pred_check
        %p214 = pneg %p136
      $region22: #{ngpt_encoder_forward.6} parent=11 // pred_check_branch
        %216 = sbr.rel (%p214) target = $region24
      $region23: #{ngpt_encoder_forward.6} parent=11 // pred_region
        %s217 = smul.u32 8, %s23
        %p218 = scmp.lt.s32.totalorder %s217, 7
        %s219 = scalar_select %p218, %s217, 7
        %s220 = smul.addr %s219, 8
        %s221 = scalar_lea.vmem %s3, %s220
        %s222 = smul.u32 8, %s23
      $region24: #{ngpt_encoder_forward.6} parent=11 // pred_fallthru
        _
      // Predicated region
      $region25: #{ngpt_encoder_forward.6} parent=11 // pred_check
        %p223 = pneg %p157
      $region26: #{ngpt_encoder_forward.6} parent=11 // pred_check_branch
        %225 = sbr.rel (%p223) target = $region28
      $region27: #{ngpt_encoder_forward.6} parent=11 // pred_region
        _
      $region28: #{ngpt_encoder_forward.6} parent=11 // pred_fallthru
        _
    $region12: #{ngpt_encoder_forward.6} parent=5 // pred_fallthru
      _
    %p226 = scmp.lt.s32.totalorder %s11, 2
    // Predicated region
    $region29: #{ngpt_encoder_forward.6} parent=5 // pred_check
      %p227 = pneg %p226
    $region30: #{ngpt_encoder_forward.6} parent=5 // pred_check_branch
      %229 = sbr.rel (%p227) target = $region32
    $region31: #{ngpt_encoder_forward.6} parent=5 // pred_region
      // Predicated region
      $region33: #{ngpt_encoder_forward.6} parent=31 // pred_check
        %p230 = pneg %p52
      $region34: #{ngpt_encoder_forward.6} parent=31 // pred_check_branch
        %232 = sbr.rel (%p230) target = $region36
      $region35: #{ngpt_encoder_forward.6} parent=31 // pred_region
        %p233 = scmp.lt.s32.totalorder %s18, 1
        %s234 = scalar_select %p233, %s18, 1
        %p235 = scmp.lt.s32.totalorder %s19, 0
        %s236 = scalar_select %p235, %s19, 0
        %s237 = sadd.s32 %s236, %s234
        %s238 = smul.addr %s237, 8
        %s239 = scalar_lea.vmem %s0, %s238
      $region36: #{ngpt_encoder_forward.6} parent=31 // pred_fallthru
        _
    $region32: #{ngpt_encoder_forward.6} parent=5 // pred_fallthru
      _
    %p240 = scmp.le.s32.totalorder 1, %s11
    %p241 = scmp.lt.s32.totalorder %s11, 3
    %p242 = pnand %p240, %p241
    %p243 = pneg %p242
    // Predicated region
    $region37: #{ngpt_encoder_forward.6} parent=5 // pred_check
      _
    $region38: #{ngpt_encoder_forward.6} parent=5 // pred_check_branch
      %245 = sbr.rel (%p242) target = $region40
    $region39: #{ngpt_encoder_forward.6} parent=5 // pred_region
      %s246 = ssub.s32 %s11, 1
      %p247 = scmp.lt.s32.totalorder %s21, 1
      %s248 = scalar_select %p247, %s21, 1
      %p249 = scmp.lt.s32.totalorder %s22, 0
      %s250 = scalar_select %p249, %s22, 0
      %s251 = sadd.s32 %s250, %s248
      %s252 = smul.addr %s251, 8
      %s253 = scalar_lea.vmem %s0, %s252
      %p254 = pneg %p58
      %p255 = pneg %p55
      %p256 = scmp.lt.s32.totalorder %s23, 0
      %s257 = scalar_select %p256, %s23, 0
      %s258 = smul.addr %s257, 8
      %s259 = scalar_lea.vmem %s1, %s258
      %p260 = pneg %p84
      %p261 = pneg %p81
      %p262 = scmp.lt.s32.totalorder %s23, 0
      %s263 = scalar_select %p262, %s23, 0
      %s264 = smul.addr %s263, 8
      %s265 = scalar_lea.vmem %s2, %s264
      %p266 = pneg %p110
      %p267 = pneg %p107
      %s268 = smul.u32 8, %s23
      %p269 = scmp.lt.s32.totalorder %s268, 7
      %s270 = scalar_select %p269, %s268, 7
      %s271 = smul.addr %s270, 8
      %s272 = scalar_lea.vmem %s3, %s271
      %p273 = pneg %p136
      %p274 = pneg %p133
      %p275 = pneg %p157
      %p276 = pneg %p154
      %p277 = pneg %p185
      %p278 = pneg %p182
      %p279 = scmp.lt.s32.totalorder %s21, 1
      %s280 = scalar_select %p279, %s21, 1
      %p281 = scmp.lt.s32.totalorder %s22, 0
      %s282 = scalar_select %p281, %s22, 0
      %s283 = sadd.s32 %s282, %s280
      %s284 = smul.addr %s283, 8
      %s285 = scalar_lea.vmem %s5, %s284
      %p286 = scmp.lt.s32.totalorder %s21, 1
      %s287 = scalar_select %p286, %s21, 1
      %p288 = scmp.lt.s32.totalorder %s22, 0
      %s289 = scalar_select %p288, %s22, 0
      %s290 = sadd.s32 %s289, %s287
      %s291 = smul.addr %s290, 8
      %s292 = scalar_lea.vmem %s0, %s291
      %p293 = scmp.lt.s32.totalorder %s23, 0
      %s294 = scalar_select %p293, %s23, 0
      %s295 = smul.addr %s294, 8
      %s296 = scalar_lea.vmem %s1, %s295
      %p297 = scmp.lt.s32.totalorder %s23, 0
      %s298 = scalar_select %p297, %s23, 0
      %s299 = smul.addr %s298, 8
      %s300 = scalar_lea.vmem %s2, %s299
      %s301 = smul.u32 8, %s23
      %p302 = scmp.lt.s32.totalorder %s301, 7
      %s303 = scalar_select %p302, %s301, 7
      %s304 = smul.addr %s303, 8
      %s305 = scalar_lea.vmem %s3, %s304
      %s306 = smul.u32 8, %s23
      %p307 = scmp.lt.s32.totalorder %s21, 1
      %s308 = scalar_select %p307, %s21, 1
      %p309 = scmp.lt.s32.totalorder %s22, 0
      %s310 = scalar_select %p309, %s22, 0
      %s311 = sadd.s32 %s310, %s308
      %s312 = smul.addr %s311, 8
      %s313 = scalar_lea.vmem %s5, %s312
      %v314 = vld [vmem:[%s292] sm:$0xff]
      %v315 = vld [vmem:[%s296] sm:$0xff]
      %v316 = vld [vmem:[%s296 + $0x8] sm:$0xff]
      %v317 = vld [vmem:[%s296 + $0x10] sm:$0xff]
      %v318 = vld [vmem:[%s296 + $0x18] sm:$0xff]
      %vm319 = vcmask 261120
      %v321 = vsel %vm319, %v314, 0
      %323 = vmatprep.subr.mxu0 0.0
      %324 = vmatpush1.msra.mxu0 0.0
      %325 = vmatprep.subr.mxu0 0.0
      %326 = vmatpush1.msra.mxu0 0.0
      %327 = vmatprep.subr.mxu0 0.0
      %328 = vmatpush1.msra.mxu0 0.0
      %329 = vmatprep.subr.mxu0 0.0
      %330 = vmatpush1.msra.mxu0 0.0
      %331 = vmatprep.subr.mxu0 0.0
      %332 = vmatpush1.msra.mxu0 0.0
      %333 = vmatprep.subr.mxu0 0.0
      %334 = vmatpush1.msra.mxu0 0.0
      %335 = vmatprep.subr.mxu0 0.0
      %336 = vmatpush1.msra.mxu0 0.0
      %337 = vmatprep.subr.mxu0 0.0
      %338 = vmatpush1.msra.mxu0 0.0
      %339 = vmatprep.subr.mxu0 0.0
      %340 = vmatpush1.msra.mxu0 0.0
      %341 = vmatprep.subr.mxu0 0.0
      %342 = vmatpush1.msra.mxu0 0.0
      %343 = vmatprep.subr.mxu0 0.0
      %344 = vmatpush1.msra.mxu0 0.0
      %345 = vmatprep.subr.mxu0 0.0
      %346 = vmatpush1.msra.mxu0 0.0
      %347 = vmatprep.subr.mxu0 0.0
      %348 = vmatpush1.msra.mxu0 %v318
      %349 = vmatprep.subr.mxu0 0.0
      %350 = vmatpush1.msra.mxu0 %v317
      %351 = vmatprep.subr.mxu0 0.0
      %352 = vmatpush1.msra.mxu0 %v316
      %353 = vmatprep.subr.mxu0 0.0
      %354 = vmatpush1.msra.mxu0 %v315
      %355 = vmatprep.subr.mxu0 0.0
      %356 = vmatpush2.msra.mxu0 0.0
      %357 = vmatprep.subr.mxu0 0.0
      %358 = vmatpush2.msra.mxu0 0.0
      %359 = vmatprep.subr.mxu0 0.0
      %360 = vmatpush2.msra.mxu0 0.0
      %361 = vmatprep.subr.mxu0 0.0
      %362 = vmatpush2.msra.mxu0 0.0
      %363 = vmatprep.subr.mxu0 0.0
      %364 = vmatpush2.msra.mxu0 0.0
      %365 = vmatprep.subr.mxu0 0.0
      %366 = vmatpush2.msra.mxu0 0.0
      %367 = vmatprep.subr.mxu0 0.0
      %368 = vmatpush2.msra.mxu0 0.0
      %369 = vmatprep.subr.mxu0 0.0
      %370 = vmatpush2.msra.mxu0 0.0
      %371 = vmatprep.subr.mxu0 0.0
      %372 = vmatpush2.msra.mxu0 0.0
      %373 = vmatprep.subr.mxu0 0.0
      %374 = vmatpush2.msra.mxu0 0.0
      %375 = vmatprep.subr.mxu0 0.0
      %376 = vmatpush2.msra.mxu0 0.0
      %377 = vmatprep.subr.mxu0 0.0
      %378 = vmatpush2.msra.mxu0 0.0
      %379 = vmatprep.subr.mxu0 0.0
      %380 = vmatpush2.msra.mxu0 0.0
      %381 = vmatprep.subr.mxu0 0.0
      %382 = vmatpush2.msra.mxu0 0.0
      %383 = vmatprep.subr.mxu0 0.0
      %384 = vmatpush2.msra.mxu0 0.0
      %385 = vmatprep.subr.mxu0 0.0
      %386 = vmatpush2.msra.mxu0 0.0
      %387 = vmatprep.mubr.f32.mxu0 0.0
      %388 = vmatmul.mubr.f32.gmra.mxu0 %v321
      %v389 = vpop.f32.mrf.mxu0
      %v390 = vadd.f32 0.0, %v389
      %v391 = vpop.f32.mrf.mxu0
      %392 = vdwg.mxu0
      %v393 = vld [vmem:[%s300] sm:$0xff]
      %v394 = vld [vmem:[%s300 + $0x8] sm:$0xff]
      %v395 = vld [vmem:[%s300 + $0x10] sm:$0xff]
      %v396 = vld [vmem:[%s300 + $0x18] sm:$0xff]
      %397 = vmatprep.subr.mxu0 0.0
      %398 = vmatpush1.msra.mxu0 0.0
      %399 = vmatprep.subr.mxu0 0.0
      %400 = vmatpush1.msra.mxu0 0.0
      %401 = vmatprep.subr.mxu0 0.0
      %402 = vmatpush1.msra.mxu0 0.0
      %403 = vmatprep.subr.mxu0 0.0
      %404 = vmatpush1.msra.mxu0 0.0
      %405 = vmatprep.subr.mxu0 0.0
      %406 = vmatpush1.msra.mxu0 0.0
      %407 = vmatprep.subr.mxu0 0.0
      %408 = vmatpush1.msra.mxu0 0.0
      %409 = vmatprep.subr.mxu0 0.0
      %410 = vmatpush1.msra.mxu0 0.0
      %411 = vmatprep.subr.mxu0 0.0
      %412 = vmatpush1.msra.mxu0 0.0
      %413 = vmatprep.subr.mxu0 0.0
      %414 = vmatpush1.msra.mxu0 0.0
      %415 = vmatprep.subr.mxu0 0.0
      %416 = vmatpush1.msra.mxu0 0.0
      %417 = vmatprep.subr.mxu0 0.0
      %418 = vmatpush1.msra.mxu0 0.0
      %419 = vmatprep.subr.mxu0 0.0
      %420 = vmatpush1.msra.mxu0 0.0
      %421 = vmatprep.subr.mxu0 0.0
      %422 = vmatpush1.msra.mxu0 %v396
      %423 = vmatprep.subr.mxu0 0.0
      %424 = vmatpush1.msra.mxu0 %v395
      %425 = vmatprep.subr.mxu0 0.0
      %426 = vmatpush1.msra.mxu0 %v394
      %427 = vmatprep.subr.mxu0 0.0
      %428 = vmatpush1.msra.mxu0 %v393
      %429 = vmatprep.subr.mxu0 0.0
      %430 = vmatpush2.msra.mxu0 0.0
      %431 = vmatprep.subr.mxu0 0.0
      %432 = vmatpush2.msra.mxu0 0.0
      %433 = vmatprep.subr.mxu0 0.0
      %434 = vmatpush2.msra.mxu0 0.0
      %435 = vmatprep.subr.mxu0 0.0
      %436 = vmatpush2.msra.mxu0 0.0
      %437 = vmatprep.subr.mxu0 0.0
      %438 = vmatpush2.msra.mxu0 0.0
      %439 = vmatprep.subr.mxu0 0.0
      %440 = vmatpush2.msra.mxu0 0.0
      %441 = vmatprep.subr.mxu0 0.0
      %442 = vmatpush2.msra.mxu0 0.0
      %443 = vmatprep.subr.mxu0 0.0
      %444 = vmatpush2.msra.mxu0 0.0
      %445 = vmatprep.subr.mxu0 0.0
      %446 = vmatpush2.msra.mxu0 0.0
      %447 = vmatprep.subr.mxu0 0.0
      %448 = vmatpush2.msra.mxu0 0.0
      %449 = vmatprep.subr.mxu0 0.0
      %450 = vmatpush2.msra.mxu0 0.0
      %451 = vmatprep.subr.mxu0 0.0
      %452 = vmatpush2.msra.mxu0 0.0
      %453 = vmatprep.subr.mxu0 0.0
      %454 = vmatpush2.msra.mxu0 0.0
      %455 = vmatprep.subr.mxu0 0.0
      %456 = vmatpush2.msra.mxu0 0.0
      %457 = vmatprep.subr.mxu0 0.0
      %458 = vmatpush2.msra.mxu0 0.0
      %459 = vmatprep.subr.mxu0 0.0
      %460 = vmatpush2.msra.mxu0 0.0
      %461 = vmatprep.mubr.f32.mxu0 0.0
      %462 = vmatmul.mubr.f32.gmra.mxu0 %v321
      %v463 = vpop.f32.mrf.mxu0
      %v464 = vadd.f32 0.0, %v463
      %v465 = vpop.f32.mrf.mxu0
      %466 = vdwg.mxu0
      %v467 = vxor.u32 %v464, 2147483648
      %v468 = vmul.f32 %v467, 1.442695
      %v469 = vpow.pop %v468
      %v470 = vadd.f32 %v469, 1.0
      %v471 = vrcp.pop %v470
      %v472 = vmul.f32 1.0, %v471
      %v473 = vmul.f32 %v464, %v472
      %v474 = vmul.f32 %v390, %v473
      %v475 = vld [vmem:[%s305] sm:$0xff]
      %v476 = vld [vmem:[%s305 + $0x8] sm:$0xff]
      %v477 = vld [vmem:[%s305 + $0x10] sm:$0xff]
      %v478 = vld [vmem:[%s305 + $0x18] sm:$0xff]
      %v479 = vld [vmem:[%s305 + $0x20] sm:$0xff]
      %v480 = vld [vmem:[%s305 + $0x28] sm:$0xff]
      %v481 = vld [vmem:[%s305 + $0x30] sm:$0xff]
      %v482 = vld [vmem:[%s305 + $0x38] sm:$0xff]
      %vm483 = vcmask 523264
      %v485 = vsel %vm483, %v474, 0
      %487 = vmatprep.subr.mxu0 0.0
      %488 = vmatpush1.msra.mxu0 0.0
      %489 = vmatprep.subr.mxu0 0.0
      %490 = vmatpush1.msra.mxu0 0.0
      %491 = vmatprep.subr.mxu0 0.0
      %492 = vmatpush1.msra.mxu0 0.0
      %493 = vmatprep.subr.mxu0 0.0
      %494 = vmatpush1.msra.mxu0 0.0
      %495 = vmatprep.subr.mxu0 0.0
      %496 = vmatpush1.msra.mxu0 0.0
      %497 = vmatprep.subr.mxu0 0.0
      %498 = vmatpush1.msra.mxu0 0.0
      %499 = vmatprep.subr.mxu0 0.0
      %500 = vmatpush1.msra.mxu0 0.0
      %501 = vmatprep.subr.mxu0 0.0
      %502 = vmatpush1.msra.mxu0 0.0
      %503 = vmatprep.subr.mxu0 0.0
      %504 = vmatpush1.msra.mxu0 %v482
      %505 = vmatprep.subr.mxu0 0.0
      %506 = vmatpush1.msra.mxu0 %v481
      %507 = vmatprep.subr.mxu0 0.0
      %508 = vmatpush1.msra.mxu0 %v480
      %509 = vmatprep.subr.mxu0 0.0
      %510 = vmatpush1.msra.mxu0 %v479
      %511 = vmatprep.subr.mxu0 0.0
      %512 = vmatpush1.msra.mxu0 %v478
      %513 = vmatprep.subr.mxu0 0.0
      %514 = vmatpush1.msra.mxu0 %v477
      %515 = vmatprep.subr.mxu0 0.0
      %516 = vmatpush1.msra.mxu0 %v476
      %517 = vmatprep.subr.mxu0 0.0
      %518 = vmatpush1.msra.mxu0 %v475
      %519 = vmatprep.subr.mxu0 0.0
      %520 = vmatpush2.msra.mxu0 0.0
      %521 = vmatprep.subr.mxu0 0.0
      %522 = vmatpush2.msra.mxu0 0.0
      %523 = vmatprep.subr.mxu0 0.0
      %524 = vmatpush2.msra.mxu0 0.0
      %525 = vmatprep.subr.mxu0 0.0
      %526 = vmatpush2.msra.mxu0 0.0
      %527 = vmatprep.subr.mxu0 0.0
      %528 = vmatpush2.msra.mxu0 0.0
      %529 = vmatprep.subr.mxu0 0.0
      %530 = vmatpush2.msra.mxu0 0.0
      %531 = vmatprep.subr.mxu0 0.0
      %532 = vmatpush2.msra.mxu0 0.0
      %533 = vmatprep.subr.mxu0 0.0
      %534 = vmatpush2.msra.mxu0 0.0
      %535 = vmatprep.subr.mxu0 0.0
      %536 = vmatpush2.msra.mxu0 0.0
      %537 = vmatprep.subr.mxu0 0.0
      %538 = vmatpush2.msra.mxu0 0.0
      %539 = vmatprep.subr.mxu0 0.0
      %540 = vmatpush2.msra.mxu0 0.0
      %541 = vmatprep.subr.mxu0 0.0
      %542 = vmatpush2.msra.mxu0 0.0
      %543 = vmatprep.subr.mxu0 0.0
      %544 = vmatpush2.msra.mxu0 0.0
      %545 = vmatprep.subr.mxu0 0.0
      %546 = vmatpush2.msra.mxu0 0.0
      %547 = vmatprep.subr.mxu0 0.0
      %548 = vmatpush2.msra.mxu0 0.0
      %549 = vmatprep.subr.mxu0 0.0
      %550 = vmatpush2.msra.mxu0 0.0
      %551 = vmatprep.mubr.f32.mxu0 0.0
      %552 = vmatmul.mubr.f32.gmra.mxu0 %v485
      %v553 = vpop.f32.mrf.mxu0
      %v554 = vadd.f32 0.0, %v553
      %v555 = vpop.f32.mrf.mxu0
      %556 = vdwg.mxu0
      %v557 = vmul.f32 %v554, %v554
      %v558 = vsel %vm319, %v557, 0.0
      %559 = vadd.xlane.f32.xlu0 %v558
      %v560 = vpop.xlane.xlu0 %559
      %v561 = vmax.f32 %v560, 1e-12
      %v562 = vrsqrt.pop %v561
      %v563 = vmul.f32 %v554, %v562
      %v564 = vld [vmem:[%s4] sm:$0x1]
      %v565 = vsub.f32 %v563, %v314
      %v567 = vlaneseq
      %v568 = vshrl.u32 %v567, 7
      %v569 = vsub.s32 0, %v568
      %v570 = vrot.slane %v564, %v569
      %v572 = vmul.f32 %v570, %v565
      %v573 = vadd.f32 %v314, %v572
      %v574 = vmul.f32 %v573, %v573
      %v575 = vsel %vm319, %v574, 0.0
      %576 = vadd.xlane.f32.xlu0 %v575
      %v577 = vpop.xlane.xlu0 %576
      %v578 = vmax.f32 %v577, 1e-12
      %v579 = vrsqrt.pop %v578
      %v580 = vmul.f32 %v573, %v579
      %581 = vst.msk [vmem:[%s313] sm:$0xff] %vm319, %v580
      %p582 = scmp.lt.s32.totalorder %s21, 1
      %s583 = scalar_select %p582, %s21, 1
      %p584 = scmp.lt.s32.totalorder %s22, 0
      %s585 = scalar_select %p584, %s22, 0
      %s586 = sadd.s32 %s585, %s583
      %s587 = smul.addr %s586, 8
      %s588 = scalar_lea.vmem %s5, %s587
      // Predicated region
      $region41: #{ngpt_encoder_forward.6} parent=39 // pred_check
        %p589 = pneg %p182
      $region42: #{ngpt_encoder_forward.6} parent=39 // pred_check_branch
        %591 = sbr.rel (%p589) target = $region44
      $region43: #{ngpt_encoder_forward.6} parent=39 // pred_region
        _
      $region44: #{ngpt_encoder_forward.6} parent=39 // pred_fallthru
        _
    $region40: #{ngpt_encoder_forward.6} parent=5 // pred_fallthru
      _
    %p592 = scmp.le.s32.totalorder 2, %s11
    // Predicated region
    $region45: #{ngpt_encoder_forward.6} parent=5 // pred_check
      %p593 = pneg %p592
    $region46: #{ngpt_encoder_forward.6} parent=5 // pred_check_branch
      %595 = sbr.rel (%p593) target = $region48
    $region47: #{ngpt_encoder_forward.6} parent=5 // pred_region
      %s596 = ssub.s32 %s11, 2
      // Predicated region
      $region49: #{ngpt_encoder_forward.6} parent=47 // pred_check
        %p597 = pneg %p188
      $region50: #{ngpt_encoder_forward.6} parent=47 // pred_check_branch
        %599 = sbr.rel (%p597) target = $region52
      $region51: #{ngpt_encoder_forward.6} parent=47 // pred_region
        %p600 = scmp.lt.s32.totalorder %s24, 1
        %s601 = scalar_select %p600, %s24, 1
        %p602 = scmp.lt.s32.totalorder %s25, 0
        %s603 = scalar_select %p602, %s25, 0
        %s604 = sadd.s32 %s603, %s601
        %s605 = smul.addr %s604, 8
        %s606 = scalar_lea.vmem %s5, %s605
      $region52: #{ngpt_encoder_forward.6} parent=47 // pred_fallthru
        _
    $region48: #{ngpt_encoder_forward.6} parent=5 // pred_fallthru
      _
  $region6: #{ngpt_encoder_forward.6} parent=0 // loop_footer
    %s15 = sadd.s32 1, %s11
  $region7: #{ngpt_encoder_forward.6} parent=0 // loop_footer_branch
    %10 = sbr.rel target = $region3
  $region8: #{ngpt_encoder_forward.6} parent=0 // loop_exit
    _

// kernel: ngpt_encoder_forward.9
$region0: #{ngpt_encoder_forward.9}
  #allocation0 [shape = 'u32[]', space=smem, size = 0x4, offset = 0x4, fixed_abs, tag = 'smem constant byte address 0x4 - core index']
  #allocation1 [shape = 'u32[144,128]{1,0:T(1,128)}', space=vmem, size = 0x12000, scoped, tag = 'internal scratch']
  %s0 = inlined_call_operand.vmem [shape: f32[2,8,32], index: 0, kind: input, shape index: {}]
  %s1 = inlined_call_operand.vmem [shape: f32[32,32], index: 1, kind: input, shape index: {}]
  %s2 = inlined_call_operand.hbm [shape: f32[2,8,32], index: 2, kind: output, shape index: {}]
  %s3 = sld [smem:[#allocation0]]
  $region41: #{ngpt_encoder_forward.9} parent=0
    _
  %s5 = ssub.s32 1, %s3
  %s6 = scalar_select 0, %s5, %s3
  $region1: #{ngpt_encoder_forward.9} parent=0
    #allocation2 [shape = 'u8[8192]{0}', space=vmem, size = 0x2000, scoped, tag = 'output window, operand 0']
    #allocation3 [shape = 's32[2]{0}', space=sflag, size = 0x8, scoped, tag = 'scoped memory for ngpt_encoder_forward.9']
    %7 = vsyncpa [#allocation3], 0
    %s8 = scalar_lea.sflag [#allocation3], 1
    %9 = vsyncpa %s8, 0
    loop: start=0, step=1, limit=4
    $region2: #{ngpt_encoder_forward.9} parent=1 // loop_pre_header
      _
    $region3: #{ngpt_encoder_forward.9} parent=1 // loop_header
      %s11 = sphi 0, %s15
      %p12 = scmp.ge.s32.totalorder %s11, 4
      %s18 = sphi 0, %s30
      %s19 = sphi 0, %s26
      %s20 = sphi 0, %s18
      %s21 = sphi 0, %s19
      %s22 = sphi 0, %s20
      %s23 = sphi 0, %s21
      %s35 = sphi 0, %s37
      %s38 = sphi 0, %s35
      %s39 = sphi 0, %s38
      %s55 = sphi 0, %s39
      %s59 = sphi 0, %s59
      %s61 = sphi 0, %s59
      %s62 = sphi 0, %s61
      %s76 = sphi 0, %s62
      %s84 = sphi 0, %s86
      %s87 = sphi 0, %s84
      %s88 = sphi 0, %s87
      %s104 = sphi 0, %s88
    $region4: #{ngpt_encoder_forward.9} parent=1 // loop_header_branch
      %14 = sbr.rel (%p12) target = $region8
    $region5: #{ngpt_encoder_forward.9} parent=1 // loop_body
      %s16 = ssub.s32 %s11, 1
      %s17 = ssub.s32 %s11, 2
      %s24 = sadd.s32 1, %s19
      %p25 = scmp.ge.s32.totalorder %s24, 1
      %s26 = scalar_select %p25, 0, %s24
      %s27 = sadd.s32 1, %s18
      %s28 = scalar_select %p25, %s27, %s18
      %p29 = scmp.ge.s32.totalorder %s28, 2
      %s30 = scalar_select %p29, 0, %s28
      %s31 = ssub.s32 %s18, %s30
      %s32 = ssub.s32 %s19, %s26
      %s33 = sor.u32 %s31, %s32
      %p34 = scmp.eq.s32.totalorder %s33, 0
      %s36 = sadd.s32 %s35, 1
      %s37 = scalar_select %p34, %s35, %s36
      %p40 = pneg %p34
      %p41 = scmp.eq.s32.totalorder %s11, 1
      %p42 = por %p40, %p41
      %p43 = scmp.ne.s32.totalorder %s35, %s38
      %p44 = scmp.eq.s32.totalorder %s11, 0
      %p45 = por %p43, %p44
      %p46 = scmp.ne.s32.totalorder %s35, %s38
      %p47 = scmp.eq.s32.totalorder %s16, 1
      %p48 = por %p46, %p47
      %p49 = scmp.ne.s32.totalorder %s38, %s39
      %p50 = scmp.eq.s32.totalorder %s16, 0
      %p51 = por %p49, %p50
      %p52 = scmp.ne.s32.totalorder %s38, %s39
      %p53 = scmp.eq.s32.totalorder %s17, 1
      %p54 = por %p52, %p53
      %p56 = scmp.ne.s32.totalorder %s39, %s55
      %p57 = scmp.eq.s32.totalorder %s17, 0
      %p58 = por %p56, %p57
      %s60 = sadd.s32 %s59, 1
      %p63 = scmp.eq.s32.totalorder %s11, 1
      %p64 = scmp.ne.s32.totalorder %s59, %s61
      %p65 = scmp.eq.s32.totalorder %s11, 0
      %p66 = por %p64, %p65
      %p67 = scmp.ne.s32.totalorder %s59, %s61
      %p68 = scmp.eq.s32.totalorder %s16, 1
      %p69 = por %p67, %p68
      %p70 = scmp.ne.s32.totalorder %s61, %s62
      %p71 = scmp.eq.s32.totalorder %s16, 0
      %p72 = por %p70, %p71
      %p73 = scmp.ne.s32.totalorder %s61, %s62
      %p74 = scmp.eq.s32.totalorder %s17, 1
      %p75 = por %p73, %p74
      %p77 = scmp.ne.s32.totalorder %s62, %s76
      %p78 = scmp.eq.s32.totalorder %s17, 0
      %p79 = por %p77, %p78
      %s80 = ssub.s32 %s18, %s30
      %s81 = ssub.s32 %s19, %s26
      %s82 = sor.u32 %s80, %s81
      %p83 = scmp.eq.s32.totalorder %s82, 0
      %s85 = sadd.s32 %s84, 1
      %s86 = scalar_select %p83, %s84, %s85
      %p89 = pneg %p83
      %p90 = scmp.eq.s32.totalorder %s11, 1
      %p91 = por %p89, %p90
      %p92 = scmp.ne.s32.totalorder %s84, %s87
      %p93 = scmp.eq.s32.totalorder %s11, 0
      %p94 = por %p92, %p93
      %p95 = scmp.ne.s32.totalorder %s84, %s87
      %p96 = scmp.eq.s32.totalorder %s16, 1
      %p97 = por %p95, %p96
      %p98 = scmp.ne.s32.totalorder %s87, %s88
      %p99 = scmp.eq.s32.totalorder %s16, 0
      %p100 = por %p98, %p99
      %p101 = scmp.ne.s32.totalorder %s87, %s88
      %p102 = scmp.eq.s32.totalorder %s17, 1
      %p103 = por %p101, %p102
      %p105 = scmp.ne.s32.totalorder %s88, %s104
      %p106 = scmp.eq.s32.totalorder %s17, 0
      %p107 = por %p105, %p106
      %p108 = scmp.le.s32.totalorder 1, %s11
      %p109 = scmp.lt.s32.totalorder %s11, 3
      %p110 = pnand %p108, %p109
      %p111 = pneg %p110
      // Predicated region
      $region9: #{ngpt_encoder_forward.9} parent=5 // pred_check
        _
      $region10: #{ngpt_encoder_forward.9} parent=5 // pred_check_branch
        %113 = sbr.rel (%p110) target = $region12
      $region11: #{ngpt_encoder_forward.9} parent=5 // pred_region
        %s114 = ssub.s32 %s11, 1
        // Predicated region
        $region13: #{ngpt_encoder_forward.9} parent=11 // pred_check
          %p115 = pneg %p72
        $region14: #{ngpt_encoder_forward.9} parent=11 // pred_check_branch
          %117 = sbr.rel (%p115) target = $region16
        $region15: #{ngpt_encoder_forward.9} parent=11 // pred_region
          _
        $region16: #{ngpt_encoder_forward.9} parent=11 // pred_fallthru
          _
      $region12: #{ngpt_encoder_forward.9} parent=5 // pred_fallthru
        _
      %p118 = scmp.lt.s32.totalorder %s11, 2
      // Predicated region
      $region17: #{ngpt_encoder_forward.9} parent=5 // pred_check
        %p119 = pneg %p118
      $region18: #{ngpt_encoder_forward.9} parent=5 // pred_check_branch
        %121 = sbr.rel (%p119) target = $region20
      $region19: #{ngpt_encoder_forward.9} parent=5 // pred_region
        // Predicated region
        $region21: #{ngpt_encoder_forward.9} parent=19 // pred_check
          %p122 = pneg %p45
        $region22: #{ngpt_encoder_forward.9} parent=19 // pred_check_branch
          %124 = sbr.rel (%p122) target = $region24
        $region23: #{ngpt_encoder_forward.9} parent=19 // pred_region
          %p125 = scmp.lt.s32.totalorder %s18, 1
          %s126 = scalar_select %p125, %s18, 1
          %p127 = scmp.lt.s32.totalorder %s19, 0
          %s128 = scalar_select %p127, %s19, 0
          %s129 = sadd.s32 %s128, %s126
          %s130 = smul.addr %s129, 8
          %s131 = scalar_lea.vmem %s0, %s130
        $region24: #{ngpt_encoder_forward.9} parent=19 // pred_fallthru
          _
      $region20: #{ngpt_encoder_forward.9} parent=5 // pred_fallthru
        _
      %p132 = scmp.le.s32.totalorder 1, %s11
      %p133 = scmp.lt.s32.totalorder %s11, 3
      %p134 = pnand %p132, %p133
      %p135 = pneg %p134
      // Predicated region
      $region25: #{ngpt_encoder_forward.9} parent=5 // pred_check
        _
      $region26: #{ngpt_encoder_forward.9} parent=5 // pred_check_branch
        %137 = sbr.rel (%p134) target = $region28
      $region27: #{ngpt_encoder_forward.9} parent=5 // pred_region
        %s138 = ssub.s32 %s11, 1
        %p139 = scmp.lt.s32.totalorder %s20, 1
        %s140 = scalar_select %p139, %s20, 1
        %p141 = scmp.lt.s32.totalorder %s21, 0
        %s142 = scalar_select %p141, %s21, 0
        %s143 = sadd.s32 %s142, %s140
        %s144 = smul.addr %s143, 8
        %s145 = scalar_lea.vmem %s0, %s144
        %p146 = pneg %p51
        %p147 = pneg %p48
        %p148 = pneg %p72
        %p149 = pneg %p69
        %p150 = pneg %p100
        %p151 = pneg %p97
        %s152 = sand.u32 %s87, 1
        %s153 = scalar_lea.sflag [#allocation3], %s152
        %s154 = sand.u32 %s87, 1
        %s155 = smul.addr %s154, 8
        %s156 = scalar_lea.vmem [#allocation2], %s155
        %p157 = scmp.lt.s32.totalorder %s20, 1
        %s158 = scalar_select %p157, %s20, 1
        %p159 = scmp.lt.s32.totalorder %s21, 0
        %s160 = scalar_select %p159, %s21, 0
        %s161 = sadd.s32 %s160, %s158
        %s162 = smul.addr %s161, 8
        %s163 = scalar_lea.vmem %s0, %s162
        %v164 = vld [vmem:[%s163] sm:$0xff]
        %v165 = vld [vmem:[%s1] sm:$0xff]
        %v166 = vld [vmem:[%s1 + $0x8] sm:$0xff]
        %v167 = vld [vmem:[%s1 + $0x10] sm:$0xff]
        %v168 = vld [vmem:[%s1 + $0x18] sm:$0xff]
        %vm169 = vcmask 261120
        %v171 = vsel %vm169, %v164, 0
        %173 = vmatprep.subr.mxu0 0.0
        %174 = vmatpush1.msra.mxu0 0.0
        %175 = vmatprep.subr.mxu0 0.0
        %176 = vmatpush1.msra.mxu0 0.0
        %177 = vmatprep.subr.mxu0 0.0
        %178 = vmatpush1.msra.mxu0 0.0
        %179 = vmatprep.subr.mxu0 0.0
        %180 = vmatpush1.msra.mxu0 0.0
        %181 = vmatprep.subr.mxu0 0.0
        %182 = vmatpush1.msra.mxu0 0.0
        %183 = vmatprep.subr.mxu0 0.0
        %184 = vmatpush1.msra.mxu0 0.0
        %185 = vmatprep.subr.mxu0 0.0
        %186 = vmatpush1.msra.mxu0 0.0
        %187 = vmatprep.subr.mxu0 0.0
        %188 = vmatpush1.msra.mxu0 0.0
        %189 = vmatprep.subr.mxu0 0.0
        %190 = vmatpush1.msra.mxu0 0.0
        %191 = vmatprep.subr.mxu0 0.0
        %192 = vmatpush1.msra.mxu0 0.0
        %193 = vmatprep.subr.mxu0 0.0
        %194 = vmatpush1.msra.mxu0 0.0
        %195 = vmatprep.subr.mxu0 0.0
        %196 = vmatpush1.msra.mxu0 0.0
        %197 = vmatprep.subr.mxu0 0.0
        %198 = vmatpush1.msra.mxu0 %v168
        %199 = vmatprep.subr.mxu0 0.0
        %200 = vmatpush1.msra.mxu0 %v167
        %201 = vmatprep.subr.mxu0 0.0
        %202 = vmatpush1.msra.mxu0 %v166
        %203 = vmatprep.subr.mxu0 0.0
        %204 = vmatpush1.msra.mxu0 %v165
        %205 = vmatprep.subr.mxu0 0.0
        %206 = vmatpush2.msra.mxu0 0.0
        %207 = vmatprep.subr.mxu0 0.0
        %208 = vmatpush2.msra.mxu0 0.0
        %209 = vmatprep.subr.mxu0 0.0
        %210 = vmatpush2.msra.mxu0 0.0
        %211 = vmatprep.subr.mxu0 0.0
        %212 = vmatpush2.msra.mxu0 0.0
        %213 = vmatprep.subr.mxu0 0.0
        %214 = vmatpush2.msra.mxu0 0.0
        %215 = vmatprep.subr.mxu0 0.0
        %216 = vmatpush2.msra.mxu0 0.0
        %217 = vmatprep.subr.mxu0 0.0
        %218 = vmatpush2.msra.mxu0 0.0
        %219 = vmatprep.subr.mxu0 0.0
        %220 = vmatpush2.msra.mxu0 0.0
        %221 = vmatprep.subr.mxu0 0.0
        %222 = vmatpush2.msra.mxu0 0.0
        %223 = vmatprep.subr.mxu0 0.0
        %224 = vmatpush2.msra.mxu0 0.0
        %225 = vmatprep.subr.mxu0 0.0
        %226 = vmatpush2.msra.mxu0 0.0
        %227 = vmatprep.subr.mxu0 0.0
        %228 = vmatpush2.msra.mxu0 0.0
        %229 = vmatprep.subr.mxu0 0.0
        %230 = vmatpush2.msra.mxu0 0.0
        %231 = vmatprep.subr.mxu0 0.0
        %232 = vmatpush2.msra.mxu0 0.0
        %233 = vmatprep.subr.mxu0 0.0
        %234 = vmatpush2.msra.mxu0 0.0
        %235 = vmatprep.subr.mxu0 0.0
        %236 = vmatpush2.msra.mxu0 0.0
        %237 = vmatprep.mubr.f32.mxu0 0.0
        %238 = vmatmul.mubr.f32.gmra.mxu0 %v171
        %v239 = vpop.f32.mrf.mxu0
        %v240 = vadd.f32 0.0, %v239
        %v241 = vpop.f32.mrf.mxu0
        %242 = vdwg.mxu0
        %243 = vst.msk [vmem:[%s156] sm:$0xff] %vm169, %v240
        %s244 = sand.u32 %s87, 1
        %s245 = scalar_lea.sflag [#allocation3], %s244
        %s246 = sand.u32 %s87, 1
        %s247 = smul.addr %s246, 8
        %s248 = scalar_lea.vmem [#allocation2], %s247
        // Predicated region
        $region29: #{ngpt_encoder_forward.9} parent=27 // pred_check
          %p249 = pneg %p97
        $region30: #{ngpt_encoder_forward.9} parent=27 // pred_check_branch
          %251 = sbr.rel (%p249) target = $region32
        $region31: #{ngpt_encoder_forward.9} parent=27 // pred_region
          %s253 = ssub.s32 128, 128
          %254 = vsyncadd %s245, %s253
          %s255 = sadd.s32 %s21, %s20
          %s256 = smul.addr %s255, 128
          %s257 = scalar_lea.hbm %s2, %s256
          %s259 = sshll.u32 %s248, 4
          %s260 = int_to_ptr.vmem [resolvable:$true] %s259
          %262 = dma.vmem_to_hbm [thread:$0]  %s260, 128, %s257, %s245
        $region32: #{ngpt_encoder_forward.9} parent=27 // pred_fallthru
          _
      $region28: #{ngpt_encoder_forward.9} parent=5 // pred_fallthru
        _
      %p263 = scmp.le.s32.totalorder 2, %s11
      // Predicated region
      $region33: #{ngpt_encoder_forward.9} parent=5 // pred_check
        %p264 = pneg %p263
      $region34: #{ngpt_encoder_forward.9} parent=5 // pred_check_branch
        %266 = sbr.rel (%p264) target = $region36
      $region35: #{ngpt_encoder_forward.9} parent=5 // pred_region
        %s267 = ssub.s32 %s11, 2
        // Predicated region
        $region37: #{ngpt_encoder_forward.9} parent=35 // pred_check
          %p268 = pneg %p103
        $region38: #{ngpt_encoder_forward.9} parent=35 // pred_check_branch
          %270 = sbr.rel (%p268) target = $region40
        $region39: #{ngpt_encoder_forward.9} parent=35 // pred_region
          %s271 = sand.u32 %s88, 1
          %s272 = scalar_lea.sflag [#allocation3], %s271
          %s273 = sand.u32 %s88, 1
          %s274 = smul.addr %s273, 8
          %s275 = scalar_lea.vmem [#allocation2], %s274
          %276 = dma.done %s272, 128
        $region40: #{ngpt_encoder_forward.9} parent=35 // pred_fallthru
          _
      $region36: #{ngpt_encoder_forward.9} parent=5 // pred_fallthru
        _
    $region6: #{ngpt_encoder_forward.9} parent=1 // loop_footer
      %s15 = sadd.s32 1, %s11
    $region7: #{ngpt_encoder_forward.9} parent=1 // loop_footer_branch
      %10 = sbr.rel target = $region3
    $region8: #{ngpt_encoder_forward.9} parent=1 // loop_exit
      _
    %277 = vsyncpa [#allocation3], 1
    %s278 = scalar_lea.sflag [#allocation3], 1
    %279 = vsyncpa %s278, 1

// kernel: ngpt_encoder_forward.5
$region0: #{ngpt_encoder_forward.5}
  #allocation0 [shape = 'u32[]', space=smem, size = 0x4, offset = 0x4, fixed_abs, tag = 'smem constant byte address 0x4 - core index']
  #allocation1 [shape = 'u32[144,128]{1,0:T(1,128)}', space=vmem, size = 0x12000, scoped, tag = 'internal scratch']
  #allocation2 [shape = 'f32[8,32]{1,0:T(8,128)}', space=vmem, size = 0x1000, scoped, tag = 'scratch operand']
  %s0 = inlined_call_operand.vmem [shape: f32[2,8,32], index: 0, kind: input, shape index: {}, may-alias: {0,1}]
  %s1 = inlined_call_operand.vmem [shape: f32[2,8,32], index: 1, kind: input, shape index: {}, may-alias: {0,1}]
  %s2 = inlined_call_operand.vmem [shape: f32[4,32,8], index: 2, kind: input, shape index: {}]
  %s3 = inlined_call_operand.vmem [shape: f32[4,32,16], index: 3, kind: input, shape index: {}]
  %s4 = inlined_call_operand.vmem [shape: f32[4,1,8], index: 4, kind: input, shape index: {}]
  %s5 = inlined_call_operand.vmem [shape: f32[4,1,8], index: 5, kind: input, shape index: {}]
  %s6 = inlined_call_operand.vmem [shape: s32[2,1,8], index: 6, kind: input, shape index: {}]
  %s7 = inlined_call_operand.vmem [shape: f32[4,8,32], index: 7, kind: input, shape index: {}]
  %s8 = inlined_call_operand.vmem [shape: f32[1,32], index: 8, kind: input, shape index: {}]
  %s9 = inlined_call_operand.vmem [shape: f32[2,8,32], index: 9, kind: output, shape index: {}]
  %s10 = sld [smem:[#allocation0]]
  $region77: #{ngpt_encoder_forward.5} parent=0
    _
  %s12 = ssub.s32 1, %s10
  %s13 = scalar_select 0, %s12, %s10
  loop: start=0, step=1, limit=10
  $region2: #{ngpt_encoder_forward.5} parent=0 // loop_pre_header
    _
  $region3: #{ngpt_encoder_forward.5} parent=0 // loop_header
    %s15 = sphi 0, %s19
    %p16 = scmp.ge.s32.totalorder %s15, 10
    %s22 = sphi 0, %s41
    %s23 = sphi 0, %s37
    %s24 = sphi 0, %s33
    %s25 = sphi 0, %s22
    %s26 = sphi 0, %s23
    %s27 = sphi 0, %s24
    %s28 = sphi 0, %s25
    %s29 = sphi 0, %s26
    %s30 = sphi 0, %s27
    %s46 = sphi 0, %s48
    %s49 = sphi 0, %s46
    %s50 = sphi 0, %s49
    %s66 = sphi 0, %s50
    %s72 = sphi 0, %s74
    %s75 = sphi 0, %s72
    %s76 = sphi 0, %s75
    %s92 = sphi 0, %s76
    %s98 = sphi 0, %s100
    %s101 = sphi 0, %s98
    %s102 = sphi 0, %s101
    %s118 = sphi 0, %s102
    %s124 = sphi 0, %s126
    %s127 = sphi 0, %s124
    %s128 = sphi 0, %s127
    %s144 = sphi 0, %s128
    %s150 = sphi 0, %s152
    %s153 = sphi 0, %s150
    %s154 = sphi 0, %s153
    %s170 = sphi 0, %s154
    %s176 = sphi 0, %s178
    %s179 = sphi 0, %s176
    %s180 = sphi 0, %s179
    %s196 = sphi 0, %s180
    %s202 = sphi 0, %s204
    %s205 = sphi 0, %s202
    %s206 = sphi 0, %s205
    %s222 = sphi 0, %s206
    %s228 = sphi 0, %s230
    %s231 = sphi 0, %s228
    %s232 = sphi 0, %s231
    %s248 = sphi 0, %s232
    %s252 = sphi 0, %s252
    %s254 = sphi 0, %s252
    %s255 = sphi 0, %s254
    %s269 = sphi 0, %s255
    %s277 = sphi 0, %s279
    %s280 = sphi 0, %s277
    %s281 = sphi 0, %s280
    %s297 = sphi 0, %s281
  $region4: #{ngpt_encoder_forward.5} parent=0 // loop_header_branch
    %18 = sbr.rel (%p16) target = $region8
  $region5: #{ngpt_encoder_forward.5} parent=0 // loop_body
    %s20 = ssub.s32 %s15, 1
    %s21 = ssub.s32 %s15, 2
    %s31 = sadd.s32 1, %s24
    %p32 = scmp.ge.s32.totalorder %s31, 4
    %s33 = scalar_select %p32, 0, %s31
    %s34 = sadd.s32 1, %s23
    %s35 = scalar_select %p32, %s34, %s23
    %p36 = scmp.ge.s32.totalorder %s35, 1
    %s37 = scalar_select %p36, 0, %s35
    %s38 = sadd.s32 1, %s22
    %s39 = scalar_select %p36, %s38, %s22
    %p40 = scmp.ge.s32.totalorder %s39, 2
    %s41 = scalar_select %p40, 0, %s39
    %s42 = ssub.s32 %s22, %s41
    %s43 = ssub.s32 %s23, %s37
    %s44 = sor.u32 %s42, %s43
    %p45 = scmp.eq.s32.totalorder %s44, 0
    %s47 = sadd.s32 %s46, 1
    %s48 = scalar_select %p45, %s46, %s47
    %p51 = pneg %p45
    %p52 = scmp.eq.s32.totalorder %s15, 7
    %p53 = por %p51, %p52
    %p54 = scmp.ne.s32.totalorder %s46, %s49
    %p55 = scmp.eq.s32.totalorder %s15, 0
    %p56 = por %p54, %p55
    %p57 = scmp.ne.s32.totalorder %s46, %s49
    %p58 = scmp.eq.s32.totalorder %s20, 7
    %p59 = por %p57, %p58
    %p60 = scmp.ne.s32.totalorder %s49, %s50
    %p61 = scmp.eq.s32.totalorder %s20, 0
    %p62 = por %p60, %p61
    %p63 = scmp.ne.s32.totalorder %s49, %s50
    %p64 = scmp.eq.s32.totalorder %s21, 7
    %p65 = por %p63, %p64
    %p67 = scmp.ne.s32.totalorder %s50, %s66
    %p68 = scmp.eq.s32.totalorder %s21, 0
    %p69 = por %p67, %p68
    %s70 = ssub.s32 %s22, %s41
    %p71 = scmp.eq.s32.totalorder %s70, 0
    %s73 = sadd.s32 %s72, 1
    %s74 = scalar_select %p71, %s72, %s73
    %p77 = pneg %p71
    %p78 = scmp.eq.s32.totalorder %s15, 7
    %p79 = por %p77, %p78
    %p80 = scmp.ne.s32.totalorder %s72, %s75
    %p81 = scmp.eq.s32.totalorder %s15, 0
    %p82 = por %p80, %p81
    %p83 = scmp.ne.s32.totalorder %s72, %s75
    %p84 = scmp.eq.s32.totalorder %s20, 7
    %p85 = por %p83, %p84
    %p86 = scmp.ne.s32.totalorder %s75, %s76
    %p87 = scmp.eq.s32.totalorder %s20, 0
    %p88 = por %p86, %p87
    %p89 = scmp.ne.s32.totalorder %s75, %s76
    %p90 = scmp.eq.s32.totalorder %s21, 7
    %p91 = por %p89, %p90
    %p93 = scmp.ne.s32.totalorder %s76, %s92
    %p94 = scmp.eq.s32.totalorder %s21, 0
    %p95 = por %p93, %p94
    %s96 = ssub.s32 %s24, %s33
    %p97 = scmp.eq.s32.totalorder %s96, 0
    %s99 = sadd.s32 %s98, 1
    %s100 = scalar_select %p97, %s98, %s99
    %p103 = pneg %p97
    %p104 = scmp.eq.s32.totalorder %s15, 7
    %p105 = por %p103, %p104
    %p106 = scmp.ne.s32.totalorder %s98, %s101
    %p107 = scmp.eq.s32.totalorder %s15, 0
    %p108 = por %p106, %p107
    %p109 = scmp.ne.s32.totalorder %s98, %s101
    %p110 = scmp.eq.s32.totalorder %s20, 7
    %p111 = por %p109, %p110
    %p112 = scmp.ne.s32.totalorder %s101, %s102
    %p113 = scmp.eq.s32.totalorder %s20, 0
    %p114 = por %p112, %p113
    %p115 = scmp.ne.s32.totalorder %s101, %s102
    %p116 = scmp.eq.s32.totalorder %s21, 7
    %p117 = por %p115, %p116
    %p119 = scmp.ne.s32.totalorder %s102, %s118
    %p120 = scmp.eq.s32.totalorder %s21, 0
    %p121 = por %p119, %p120
    %s122 = ssub.s32 %s24, %s33
    %p123 = scmp.eq.s32.totalorder %s122, 0
    %s125 = sadd.s32 %s124, 1
    %s126 = scalar_select %p123, %s124, %s125
    %p129 = pneg %p123
    %p130 = scmp.eq.s32.totalorder %s15, 7
    %p131 = por %p129, %p130
    %p132 = scmp.ne.s32.totalorder %s124, %s127
    %p133 = scmp.eq.s32.totalorder %s15, 0
    %p134 = por %p132, %p133
    %p135 = scmp.ne.s32.totalorder %s124, %s127
    %p136 = scmp.eq.s32.totalorder %s20, 7
    %p137 = por %p135, %p136
    %p138 = scmp.ne.s32.totalorder %s127, %s128
    %p139 = scmp.eq.s32.totalorder %s20, 0
    %p140 = por %p138, %p139
    %p141 = scmp.ne.s32.totalorder %s127, %s128
    %p142 = scmp.eq.s32.totalorder %s21, 7
    %p143 = por %p141, %p142
    %p145 = scmp.ne.s32.totalorder %s128, %s144
    %p146 = scmp.eq.s32.totalorder %s21, 0
    %p147 = por %p145, %p146
    %s148 = ssub.s32 %s24, %s33
    %p149 = scmp.eq.s32.totalorder %s148, 0
    %s151 = sadd.s32 %s150, 1
    %s152 = scalar_select %p149, %s150, %s151
    %p155 = pneg %p149
    %p156 = scmp.eq.s32.totalorder %s15, 7
    %p157 = por %p155, %p156
    %p158 = scmp.ne.s32.totalorder %s150, %s153
    %p159 = scmp.eq.s32.totalorder %s15, 0
    %p160 = por %p158, %p159
    %p161 = scmp.ne.s32.totalorder %s150, %s153
    %p162 = scmp.eq.s32.totalorder %s20, 7
    %p163 = por %p161, %p162
    %p164 = scmp.ne.s32.totalorder %s153, %s154
    %p165 = scmp.eq.s32.totalorder %s20, 0
    %p166 = por %p164, %p165
    %p167 = scmp.ne.s32.totalorder %s153, %s154
    %p168 = scmp.eq.s32.totalorder %s21, 7
    %p169 = por %p167, %p168
    %p171 = scmp.ne.s32.totalorder %s154, %s170
    %p172 = scmp.eq.s32.totalorder %s21, 0
    %p173 = por %p171, %p172
    %s174 = ssub.s32 %s24, %s33
    %p175 = scmp.eq.s32.totalorder %s174, 0
    %s177 = sadd.s32 %s176, 1
    %s178 = scalar_select %p175, %s176, %s177
    %p181 = pneg %p175
    %p182 = scmp.eq.s32.totalorder %s15, 7
    %p183 = por %p181, %p182
    %p184 = scmp.ne.s32.totalorder %s176, %s179
    %p185 = scmp.eq.s32.totalorder %s15, 0
    %p186 = por %p184, %p185
    %p187 = scmp.ne.s32.totalorder %s176, %s179
    %p188 = scmp.eq.s32.totalorder %s20, 7
    %p189 = por %p187, %p188
    %p190 = scmp.ne.s32.totalorder %s179, %s180
    %p191 = scmp.eq.s32.totalorder %s20, 0
    %p192 = por %p190, %p191
    %p193 = scmp.ne.s32.totalorder %s179, %s180
    %p194 = scmp.eq.s32.totalorder %s21, 7
    %p195 = por %p193, %p194
    %p197 = scmp.ne.s32.totalorder %s180, %s196
    %p198 = scmp.eq.s32.totalorder %s21, 0
    %p199 = por %p197, %p198
    %s200 = ssub.s32 %s22, %s41
    %p201 = scmp.eq.s32.totalorder %s200, 0
    %s203 = sadd.s32 %s202, 1
    %s204 = scalar_select %p201, %s202, %s203
    %p207 = pneg %p201
    %p208 = scmp.eq.s32.totalorder %s15, 7
    %p209 = por %p207, %p208
    %p210 = scmp.ne.s32.totalorder %s202, %s205
    %p211 = scmp.eq.s32.totalorder %s15, 0
    %p212 = por %p210, %p211
    %p213 = scmp.ne.s32.totalorder %s202, %s205
    %p214 = scmp.eq.s32.totalorder %s20, 7
    %p215 = por %p213, %p214
    %p216 = scmp.ne.s32.totalorder %s205, %s206
    %p217 = scmp.eq.s32.totalorder %s20, 0
    %p218 = por %p216, %p217
    %p219 = scmp.ne.s32.totalorder %s205, %s206
    %p220 = scmp.eq.s32.totalorder %s21, 7
    %p221 = por %p219, %p220
    %p223 = scmp.ne.s32.totalorder %s206, %s222
    %p224 = scmp.eq.s32.totalorder %s21, 0
    %p225 = por %p223, %p224
    %s226 = ssub.s32 %s24, %s33
    %p227 = scmp.eq.s32.totalorder %s226, 0
    %s229 = sadd.s32 %s228, 1
    %s230 = scalar_select %p227, %s228, %s229
    %p233 = pneg %p227
    %p234 = scmp.eq.s32.totalorder %s15, 7
    %p235 = por %p233, %p234
    %p236 = scmp.ne.s32.totalorder %s228, %s231
    %p237 = scmp.eq.s32.totalorder %s15, 0
    %p238 = por %p236, %p237
    %p239 = scmp.ne.s32.totalorder %s228, %s231
    %p240 = scmp.eq.s32.totalorder %s20, 7
    %p241 = por %p239, %p240
    %p242 = scmp.ne.s32.totalorder %s231, %s232
    %p243 = scmp.eq.s32.totalorder %s20, 0
    %p244 = por %p242, %p243
    %p245 = scmp.ne.s32.totalorder %s231, %s232
    %p246 = scmp.eq.s32.totalorder %s21, 7
    %p247 = por %p245, %p246
    %p249 = scmp.ne.s32.totalorder %s232, %s248
    %p250 = scmp.eq.s32.totalorder %s21, 0
    %p251 = por %p249, %p250
    %s253 = sadd.s32 %s252, 1
    %p256 = scmp.eq.s32.totalorder %s15, 7
    %p257 = scmp.ne.s32.totalorder %s252, %s254
    %p258 = scmp.eq.s32.totalorder %s15, 0
    %p259 = por %p257, %p258
    %p260 = scmp.ne.s32.totalorder %s252, %s254
    %p261 = scmp.eq.s32.totalorder %s20, 7
    %p262 = por %p260, %p261
    %p263 = scmp.ne.s32.totalorder %s254, %s255
    %p264 = scmp.eq.s32.totalorder %s20, 0
    %p265 = por %p263, %p264
    %p266 = scmp.ne.s32.totalorder %s254, %s255
    %p267 = scmp.eq.s32.totalorder %s21, 7
    %p268 = por %p266, %p267
    %p270 = scmp.ne.s32.totalorder %s255, %s269
    %p271 = scmp.eq.s32.totalorder %s21, 0
    %p272 = por %p270, %p271
    %s273 = ssub.s32 %s22, %s41
    %s274 = ssub.s32 %s23, %s37
    %s275 = sor.u32 %s273, %s274
    %p276 = scmp.eq.s32.totalorder %s275, 0
    %s278 = sadd.s32 %s277, 1
    %s279 = scalar_select %p276, %s277, %s278
    %p282 = pneg %p276
    %p283 = scmp.eq.s32.totalorder %s15, 7
    %p284 = por %p282, %p283
    %p285 = scmp.ne.s32.totalorder %s277, %s280
    %p286 = scmp.eq.s32.totalorder %s15, 0
    %p287 = por %p285, %p286
    %p288 = scmp.ne.s32.totalorder %s277, %s280
    %p289 = scmp.eq.s32.totalorder %s20, 7
    %p290 = por %p288, %p289
    %p291 = scmp.ne.s32.totalorder %s280, %s281
    %p292 = scmp.eq.s32.totalorder %s20, 0
    %p293 = por %p291, %p292
    %p294 = scmp.ne.s32.totalorder %s280, %s281
    %p295 = scmp.eq.s32.totalorder %s21, 7
    %p296 = por %p294, %p295
    %p298 = scmp.ne.s32.totalorder %s281, %s297
    %p299 = scmp.eq.s32.totalorder %s21, 0
    %p300 = por %p298, %p299
    %p301 = scmp.le.s32.totalorder 1, %s15
    %p302 = scmp.lt.s32.totalorder %s15, 9
    %p303 = pnand %p301, %p302
    %p304 = pneg %p303
    // Predicated region
    $region9: #{ngpt_encoder_forward.5} parent=5 // pred_check
      _
    $region10: #{ngpt_encoder_forward.5} parent=5 // pred_check_branch
      %306 = sbr.rel (%p303) target = $region12
    $region11: #{ngpt_encoder_forward.5} parent=5 // pred_region
      %s307 = ssub.s32 %s15, 1
      // Predicated region
      $region13: #{ngpt_encoder_forward.5} parent=11 // pred_check
        %p308 = pneg %p265
      $region14: #{ngpt_encoder_forward.5} parent=11 // pred_check_branch
        %310 = sbr.rel (%p308) target = $region16
      $region15: #{ngpt_encoder_forward.5} parent=11 // pred_region
        _
      $region16: #{ngpt_encoder_forward.5} parent=11 // pred_fallthru
        _
    $region12: #{ngpt_encoder_forward.5} parent=5 // pred_fallthru
      _
    %p311 = scmp.lt.s32.totalorder %s15, 8
    // Predicated region
    $region17: #{ngpt_encoder_forward.5} parent=5 // pred_check
      %p312 = pneg %p311
    $region18: #{ngpt_encoder_forward.5} parent=5 // pred_check_branch
      %314 = sbr.rel (%p312) target = $region20
    $region19: #{ngpt_encoder_forward.5} parent=5 // pred_region
      // Predicated region
      $region21: #{ngpt_encoder_forward.5} parent=19 // pred_check
        %p315 = pneg %p56
      $region22: #{ngpt_encoder_forward.5} parent=19 // pred_check_branch
        %317 = sbr.rel (%p315) target = $region24
      $region23: #{ngpt_encoder_forward.5} parent=19 // pred_region
        %p318 = scmp.lt.s32.totalorder %s22, 1
        %s319 = scalar_select %p318, %s22, 1
        %p320 = scmp.lt.s32.totalorder %s23, 0
        %s321 = scalar_select %p320, %s23, 0
        %s322 = sadd.s32 %s321, %s319
        %s323 = smul.addr %s322, 8
        %s324 = scalar_lea.vmem %s0, %s323
      $region24: #{ngpt_encoder_forward.5} parent=19 // pred_fallthru
        _
      // Predicated region
      $region25: #{ngpt_encoder_forward.5} parent=19 // pred_check
        %p325 = pneg %p82
      $region26: #{ngpt_encoder_forward.5} parent=19 // pred_check_branch
        %327 = sbr.rel (%p325) target = $region28
      $region27: #{ngpt_encoder_forward.5} parent=19 // pred_region
        %p328 = scmp.lt.s32.totalorder %s22, 1
        %s329 = scalar_select %p328, %s22, 1
        %s330 = smul.addr %s329, 8
        %s331 = scalar_lea.vmem %s1, %s330
      $region28: #{ngpt_encoder_forward.5} parent=19 // pred_fallthru
        _
      // Predicated region
      $region29: #{ngpt_encoder_forward.5} parent=19 // pred_check
        %p332 = pneg %p108
      $region30: #{ngpt_encoder_forward.5} parent=19 // pred_check_branch
        %334 = sbr.rel (%p332) target = $region32
      $region31: #{ngpt_encoder_forward.5} parent=19 // pred_region
        %p335 = scmp.lt.s32.totalorder %s24, 3
        %s336 = scalar_select %p335, %s24, 3
        %s337 = smul.addr %s336, 4
        %s338 = smul.addr %s337, 8
        %s339 = scalar_lea.vmem %s2, %s338
      $region32: #{ngpt_encoder_forward.5} parent=19 // pred_fallthru
        _
      // Predicated region
      $region33: #{ngpt_encoder_forward.5} parent=19 // pred_check
        %p340 = pneg %p134
      $region34: #{ngpt_encoder_forward.5} parent=19 // pred_check_branch
        %342 = sbr.rel (%p340) target = $region36
      $region35: #{ngpt_encoder_forward.5} parent=19 // pred_region
        %p343 = scmp.lt.s32.totalorder %s24, 3
        %s344 = scalar_select %p343, %s24, 3
        %s345 = smul.addr %s344, 4
        %s346 = smul.addr %s345, 8
        %s347 = scalar_lea.vmem %s3, %s346
      $region36: #{ngpt_encoder_forward.5} parent=19 // pred_fallthru
        _
      // Predicated region
      $region37: #{ngpt_encoder_forward.5} parent=19 // pred_check
        %p348 = pneg %p160
      $region38: #{ngpt_encoder_forward.5} parent=19 // pred_check_branch
        %350 = sbr.rel (%p348) target = $region40
      $region39: #{ngpt_encoder_forward.5} parent=19 // pred_region
        %p351 = scmp.lt.s32.totalorder %s24, 3
        %s352 = scalar_select %p351, %s24, 3
        %s353 = scalar_lea.vmem %s4, %s352
      $region40: #{ngpt_encoder_forward.5} parent=19 // pred_fallthru
        _
      // Predicated region
      $region41: #{ngpt_encoder_forward.5} parent=19 // pred_check
        %p354 = pneg %p186
      $region42: #{ngpt_encoder_forward.5} parent=19 // pred_check_branch
        %356 = sbr.rel (%p354) target = $region44
      $region43: #{ngpt_encoder_forward.5} parent=19 // pred_region
        %p357 = scmp.lt.s32.totalorder %s24, 3
        %s358 = scalar_select %p357, %s24, 3
        %s359 = scalar_lea.vmem %s5, %s358
      $region44: #{ngpt_encoder_forward.5} parent=19 // pred_fallthru
        _
      // Predicated region
      $region45: #{ngpt_encoder_forward.5} parent=19 // pred_check
        %p360 = pneg %p212
      $region46: #{ngpt_encoder_forward.5} parent=19 // pred_check_branch
        %362 = sbr.rel (%p360) target = $region48
      $region47: #{ngpt_encoder_forward.5} parent=19 // pred_region
        %p363 = scmp.lt.s32.totalorder %s22, 1
        %s364 = scalar_select %p363, %s22, 1
        %s365 = scalar_lea.vmem %s6, %s364
      $region48: #{ngpt_encoder_forward.5} parent=19 // pred_fallthru
        _
      // Predicated region
      $region49: #{ngpt_encoder_forward.5} parent=19 // pred_check
        %p366 = pneg %p238
      $region50: #{ngpt_encoder_forward.5} parent=19 // pred_check_branch
        %368 = sbr.rel (%p366) target = $region52
      $region51: #{ngpt_encoder_forward.5} parent=19 // pred_region
        %p369 = scmp.lt.s32.totalorder %s24, 3
        %s370 = scalar_select %p369, %s24, 3
        %s371 = smul.addr %s370, 8
        %s372 = scalar_lea.vmem %s7, %s371
      $region52: #{ngpt_encoder_forward.5} parent=19 // pred_fallthru
        _
    $region20: #{ngpt_encoder_forward.5} parent=5 // pred_fallthru
      _
    %p373 = scmp.le.s32.totalorder 1, %s15
    %p374 = scmp.lt.s32.totalorder %s15, 9
    %p375 = pnand %p373, %p374
    %p376 = pneg %p375
    // Predicated region
    $region53: #{ngpt_encoder_forward.5} parent=5 // pred_check
      _
    $region54: #{ngpt_encoder_forward.5} parent=5 // pred_check_branch
      %378 = sbr.rel (%p375) target = $region56
    $region55: #{ngpt_encoder_forward.5} parent=5 // pred_region
      %s379 = ssub.s32 %s15, 1
      %p380 = scmp.lt.s32.totalorder %s25, 1
      %s381 = scalar_select %p380, %s25, 1
      %p382 = scmp.lt.s32.totalorder %s26, 0
      %s383 = scalar_select %p382, %s26, 0
      %s384 = sadd.s32 %s383, %s381
      %s385 = smul.addr %s384, 8
      %s386 = scalar_lea.vmem %s0, %s385
      %p387 = pneg %p62
      %p388 = pneg %p59
      %p389 = scmp.lt.s32.totalorder %s25, 1
      %s390 = scalar_select %p389, %s25, 1
      %s391 = smul.addr %s390, 8
      %s392 = scalar_lea.vmem %s1, %s391
      %p393 = pneg %p88
      %p394 = pneg %p85
      %p395 = scmp.lt.s32.totalorder %s27, 3
      %s396 = scalar_select %p395, %s27, 3
      %s397 = smul.addr %s396, 4
      %s398 = smul.addr %s397, 8
      %s399 = scalar_lea.vmem %s2, %s398
      %p400 = pneg %p114
      %p401 = pneg %p111
      %p402 = scmp.lt.s32.totalorder %s27, 3
      %s403 = scalar_select %p402, %s27, 3
      %s404 = smul.addr %s403, 4
      %s405 = smul.addr %s404, 8
      %s406 = scalar_lea.vmem %s3, %s405
      %p407 = pneg %p140
      %p408 = pneg %p137
      %p409 = scmp.lt.s32.totalorder %s27, 3
      %s410 = scalar_select %p409, %s27, 3
      %s411 = scalar_lea.vmem %s4, %s410
      %p412 = pneg %p166
      %p413 = pneg %p163
      %p414 = scmp.lt.s32.totalorder %s27, 3
      %s415 = scalar_select %p414, %s27, 3
      %s416 = scalar_lea.vmem %s5, %s415
      %p417 = pneg %p192
      %p418 = pneg %p189
      %p419 = scmp.lt.s32.totalorder %s25, 1
      %s420 = scalar_select %p419, %s25, 1
      %s421 = scalar_lea.vmem %s6, %s420
      %p422 = pneg %p218
      %p423 = pneg %p215
      %p424 = scmp.lt.s32.totalorder %s27, 3
      %s425 = scalar_select %p424, %s27, 3
      %s426 = smul.addr %s425, 8
      %s427 = scalar_lea.vmem %s7, %s426
      %p428 = pneg %p244
      %p429 = pneg %p241
      %p430 = pneg %p265
      %p431 = pneg %p262
      %p432 = pneg %p293
      %p433 = pneg %p290
      %p434 = scmp.lt.s32.totalorder %s25, 1
      %s435 = scalar_select %p434, %s25, 1
      %p436 = scmp.lt.s32.totalorder %s26, 0
      %s437 = scalar_select %p436, %s26, 0
      %s438 = sadd.s32 %s437, %s435
      %s439 = smul.addr %s438, 8
      %s440 = scalar_lea.vmem %s9, %s439
      %p441 = scmp.lt.s32.totalorder %s25, 1
      %s442 = scalar_select %p441, %s25, 1
      %p443 = scmp.lt.s32.totalorder %s26, 0
      %s444 = scalar_select %p443, %s26, 0
      %s445 = sadd.s32 %s444, %s442
      %s446 = smul.addr %s445, 8
      %s447 = scalar_lea.vmem %s0, %s446
      %p448 = scmp.lt.s32.totalorder %s25, 1
      %s449 = scalar_select %p448, %s25, 1
      %s450 = smul.addr %s449, 8
      %s451 = scalar_lea.vmem %s1, %s450
      %p452 = scmp.lt.s32.totalorder %s27, 3
      %s453 = scalar_select %p452, %s27, 3
      %s454 = smul.addr %s453, 4
      %s455 = smul.addr %s454, 8
      %s456 = scalar_lea.vmem %s2, %s455
      %p457 = scmp.lt.s32.totalorder %s27, 3
      %s458 = scalar_select %p457, %s27, 3
      %s459 = smul.addr %s458, 4
      %s460 = smul.addr %s459, 8
      %s461 = scalar_lea.vmem %s3, %s460
      %p462 = scmp.lt.s32.totalorder %s27, 3
      %s463 = scalar_select %p462, %s27, 3
      %s464 = scalar_lea.vmem %s4, %s463
      %p465 = scmp.lt.s32.totalorder %s27, 3
      %s466 = scalar_select %p465, %s27, 3
      %s467 = scalar_lea.vmem %s5, %s466
      %p468 = scmp.lt.s32.totalorder %s25, 1
      %s469 = scalar_select %p468, %s25, 1
      %s470 = scalar_lea.vmem %s6, %s469
      %p471 = scmp.lt.s32.totalorder %s27, 3
      %s472 = scalar_select %p471, %s27, 3
      %s473 = smul.addr %s472, 8
      %s474 = scalar_lea.vmem %s7, %s473
      %p475 = scmp.lt.s32.totalorder %s25, 1
      %s476 = scalar_select %p475, %s25, 1
      %p477 = scmp.lt.s32.totalorder %s26, 0
      %s478 = scalar_select %p477, %s26, 0
      %s479 = sadd.s32 %s478, %s476
      %s480 = smul.addr %s479, 8
      %s481 = scalar_lea.vmem %s9, %s480
      %p482 = scmp.eq.s32.totalorder %s27, 0
      // Predicated region
      $region57: #{ngpt_encoder_forward.5} parent=55 // pred_check
        %p483 = pneg %p482
      $region58: #{ngpt_encoder_forward.5} parent=55 // pred_check_branch
        %485 = sbr.rel (%p483) target = $region60
      $region59: #{ngpt_encoder_forward.5} parent=55 // pred_region
        %vm486 = vcmask 261120
        %487 = vst.msk [vmem:[#allocation2] sm:$0xff] %vm486, 0.0
      $region60: #{ngpt_encoder_forward.5} parent=55 // pred_fallthru
        _
      %v488 = vld [vmem:[%s447] sm:$0xff]
      %v489 = vld [vmem:[%s451] sm:$0xff]
      %v490 = vld [vmem:[%s456] sm:$0xff]
      %v491 = vld [vmem:[%s456 + $0x8] sm:$0xff]
      %v492 = vld [vmem:[%s456 + $0x10] sm:$0xff]
      %v493 = vld [vmem:[%s456 + $0x18] sm:$0xff]
      %vm494 = vcmask 261120
      %v496 = vsel %vm494, %v488, 0
      %498 = vmatprep.subr.mxu0 0.0
      %499 = vmatpush1.msra.mxu0 0.0
      %500 = vmatprep.subr.mxu0 0.0
      %501 = vmatpush1.msra.mxu0 0.0
      %502 = vmatprep.subr.mxu0 0.0
      %503 = vmatpush1.msra.mxu0 0.0
      %504 = vmatprep.subr.mxu0 0.0
      %505 = vmatpush1.msra.mxu0 0.0
      %506 = vmatprep.subr.mxu0 0.0
      %507 = vmatpush1.msra.mxu0 0.0
      %508 = vmatprep.subr.mxu0 0.0
      %509 = vmatpush1.msra.mxu0 0.0
      %510 = vmatprep.subr.mxu0 0.0
      %511 = vmatpush1.msra.mxu0 0.0
      %512 = vmatprep.subr.mxu0 0.0
      %513 = vmatpush1.msra.mxu0 0.0
      %514 = vmatprep.subr.mxu0 0.0
      %515 = vmatpush1.msra.mxu0 0.0
      %516 = vmatprep.subr.mxu0 0.0
      %517 = vmatpush1.msra.mxu0 0.0
      %518 = vmatprep.subr.mxu0 0.0
      %519 = vmatpush1.msra.mxu0 0.0
      %520 = vmatprep.subr.mxu0 0.0
      %521 = vmatpush1.msra.mxu0 0.0
      %522 = vmatprep.subr.mxu0 0.0
      %523 = vmatpush1.msra.mxu0 %v493
      %524 = vmatprep.subr.mxu0 0.0
      %525 = vmatpush1.msra.mxu0 %v492
      %526 = vmatprep.subr.mxu0 0.0
      %527 = vmatpush1.msra.mxu0 %v491
      %528 = vmatprep.subr.mxu0 0.0
      %529 = vmatpush1.msra.mxu0 %v490
      %530 = vmatprep.subr.mxu0 0.0
      %531 = vmatpush2.msra.mxu0 0.0
      %532 = vmatprep.subr.mxu0 0.0
      %533 = vmatpush2.msra.mxu0 0.0
      %534 = vmatprep.subr.mxu0 0.0
      %535 = vmatpush2.msra.mxu0 0.0
      %536 = vmatprep.subr.mxu0 0.0
      %537 = vmatpush2.msra.mxu0 0.0
      %538 = vmatprep.subr.mxu0 0.0
      %539 = vmatpush2.msra.mxu0 0.0
      %540 = vmatprep.subr.mxu0 0.0
      %541 = vmatpush2.msra.mxu0 0.0
      %542 = vmatprep.subr.mxu0 0.0
      %543 = vmatpush2.msra.mxu0 0.0
      %544 = vmatprep.subr.mxu0 0.0
      %545 = vmatpush2.msra.mxu0 0.0
      %546 = vmatprep.subr.mxu0 0.0
      %547 = vmatpush2.msra.mxu0 0.0
      %548 = vmatprep.subr.mxu0 0.0
      %549 = vmatpush2.msra.mxu0 0.0
      %550 = vmatprep.subr.mxu0 0.0
      %551 = vmatpush2.msra.mxu0 0.0
      %552 = vmatprep.subr.mxu0 0.0
      %553 = vmatpush2.msra.mxu0 0.0
      %554 = vmatprep.subr.mxu0 0.0
      %555 = vmatpush2.msra.mxu0 0.0
      %556 = vmatprep.subr.mxu0 0.0
      %557 = vmatpush2.msra.mxu0 0.0
      %558 = vmatprep.subr.mxu0 0.0
      %559 = vmatpush2.msra.mxu0 0.0
      %560 = vmatprep.subr.mxu0 0.0
      %561 = vmatpush2.msra.mxu0 0.0
      %562 = vmatprep.mubr.f32.mxu0 0.0
      %563 = vmatmul.mubr.f32.gmra.mxu0 %v496
      %v564 = vpop.f32.mrf.mxu0
      %v565 = vadd.f32 0.0, %v564
      %v566 = vpop.f32.mrf.mxu0
      %567 = vdwg.mxu0
      %v568 = vld [vmem:[%s461] sm:$0xff]
      %v569 = vld [vmem:[%s461 + $0x8] sm:$0xff]
      %v570 = vld [vmem:[%s461 + $0x10] sm:$0xff]
      %v571 = vld [vmem:[%s461 + $0x18] sm:$0xff]
      %v573 = vsel %vm494, %v489, 0
      %575 = vmatprep.subr.mxu0 0.0
      %576 = vmatpush1.msra.mxu0 0.0
      %577 = vmatprep.subr.mxu0 0.0
      %578 = vmatpush1.msra.mxu0 0.0
      %579 = vmatprep.subr.mxu0 0.0
      %580 = vmatpush1.msra.mxu0 0.0
      %581 = vmatprep.subr.mxu0 0.0
      %582 = vmatpush1.msra.mxu0 0.0
      %583 = vmatprep.subr.mxu0 0.0
      %584 = vmatpush1.msra.mxu0 0.0
      %585 = vmatprep.subr.mxu0 0.0
      %586 = vmatpush1.msra.mxu0 0.0
      %587 = vmatprep.subr.mxu0 0.0
      %588 = vmatpush1.msra.mxu0 0.0
      %589 = vmatprep.subr.mxu0 0.0
      %590 = vmatpush1.msra.mxu0 0.0
      %591 = vmatprep.subr.mxu0 0.0
      %592 = vmatpush1.msra.mxu0 0.0
      %593 = vmatprep.subr.mxu0 0.0
      %594 = vmatpush1.msra.mxu0 0.0
      %595 = vmatprep.subr.mxu0 0.0
      %596 = vmatpush1.msra.mxu0 0.0
      %597 = vmatprep.subr.mxu0 0.0
      %598 = vmatpush1.msra.mxu0 0.0
      %599 = vmatprep.subr.mxu0 0.0
      %600 = vmatpush1.msra.mxu0 %v571
      %601 = vmatprep.subr.mxu0 0.0
      %602 = vmatpush1.msra.mxu0 %v570
      %603 = vmatprep.subr.mxu0 0.0
      %604 = vmatpush1.msra.mxu0 %v569
      %605 = vmatprep.subr.mxu0 0.0
      %606 = vmatpush1.msra.mxu0 %v568
      %607 = vmatprep.subr.mxu0 0.0
      %608 = vmatpush2.msra.mxu0 0.0
      %609 = vmatprep.subr.mxu0 0.0
      %610 = vmatpush2.msra.mxu0 0.0
      %611 = vmatprep.subr.mxu0 0.0
      %612 = vmatpush2.msra.mxu0 0.0
      %613 = vmatprep.subr.mxu0 0.0
      %614 = vmatpush2.msra.mxu0 0.0
      %615 = vmatprep.subr.mxu0 0.0
      %616 = vmatpush2.msra.mxu0 0.0
      %617 = vmatprep.subr.mxu0 0.0
      %618 = vmatpush2.msra.mxu0 0.0
      %619 = vmatprep.subr.mxu0 0.0
      %620 = vmatpush2.msra.mxu0 0.0
      %621 = vmatprep.subr.mxu0 0.0
      %622 = vmatpush2.msra.mxu0 0.0
      %623 = vmatprep.subr.mxu0 0.0
      %624 = vmatpush2.msra.mxu0 0.0
      %625 = vmatprep.subr.mxu0 0.0
      %626 = vmatpush2.msra.mxu0 0.0
      %627 = vmatprep.subr.mxu0 0.0
      %628 = vmatpush2.msra.mxu0 0.0
      %629 = vmatprep.subr.mxu0 0.0
      %630 = vmatpush2.msra.mxu0 0.0
      %631 = vmatprep.subr.mxu0 0.0
      %632 = vmatpush2.msra.mxu0 0.0
      %633 = vmatprep.subr.mxu0 0.0
      %634 = vmatpush2.msra.mxu0 0.0
      %635 = vmatprep.subr.mxu0 0.0
      %636 = vmatpush2.msra.mxu0 0.0
      %637 = vmatprep.subr.mxu0 0.0
      %638 = vmatpush2.msra.mxu0 0.0
      %639 = vmatprep.mubr.f32.mxu0 0.0
      %640 = vmatmul.mubr.f32.gmra.mxu0 %v573
      %v641 = vpop.f32.mrf.mxu0
      %v642 = vadd.f32 0.0, %v641
      %v643 = vpop.f32.mrf.mxu0
      %644 = vdwg.mxu0
      %v645 = vld [vmem:[%s464] sm:$0x1]
      %v646 = vmul.f32 %v565, %v565
      %vm647 = vcmask 64512
      %v648 = vsel %vm647, %v646, 0.0
      %649 = vadd.xlane.f32.xlu0 %v648
      %v650 = vpop.xlane.xlu0 %649
      %v651 = vmax.f32 %v650, 1e-12
      %v652 = vrsqrt.pop %v651
      %v654 = vlaneseq
      %v655 = vshrl.u32 %v654, 7
      %v656 = vsub.s32 0, %v655
      %v657 = vrot.slane %v645, %v656
      %v659 = vmul.f32 %v657, %v652
      %v660 = vmul.f32 %v565, %v659
      %v661 = vld [vmem:[%s467] sm:$0x1]
      %v662 = vmul.f32 %v642, %v642
      %v663 = vsel %vm647, %v662, 0.0
      %664 = vadd.xlane.f32.xlu0 %v663
      %v665 = vpop.xlane.xlu0 %664
      %v666 = vmax.f32 %v665, 1e-12
      %v667 = vrsqrt.pop %v666
      %v669 = vlaneseq
      %v670 = vshrl.u32 %v669, 7
      %v671 = vsub.s32 0, %v670
      %v672 = vrot.slane %v661, %v671
      %v674 = vmul.f32 %v672, %v667
      %v675 = vmul.f32 %v642, %v674
      %v677 = vsel %vm647, %v660, 0
      %v680 = vsel %vm647, %v675, 0
      %682 = vmatprep.subr.mxu0 0.0
      %683 = vmatpush1.xpose.msra.mxu0 0.0
      %684 = vmatprep.subr.mxu0 0.0
      %685 = vmatpush1.xpose.msra.mxu0 0.0
      %686 = vmatprep.subr.mxu0 0.0
      %687 = vmatpush1.xpose.msra.mxu0 0.0
      %688 = vmatprep.subr.mxu0 0.0
      %689 = vmatpush1.xpose.msra.mxu0 0.0
      %690 = vmatprep.subr.mxu0 0.0
      %691 = vmatpush1.xpose.msra.mxu0 0.0
      %692 = vmatprep.subr.mxu0 0.0
      %693 = vmatpush1.xpose.msra.mxu0 0.0
      %694 = vmatprep.subr.mxu0 0.0
      %695 = vmatpush1.xpose.msra.mxu0 0.0
      %696 = vmatprep.subr.mxu0 0.0
      %697 = vmatpush1.xpose.msra.mxu0 0.0
      %698 = vmatprep.subr.mxu0 0.0
      %699 = vmatpush1.xpose.msra.mxu0 0.0
      %700 = vmatprep.subr.mxu0 0.0
      %701 = vmatpush1.xpose.msra.mxu0 0.0
      %702 = vmatprep.subr.mxu0 0.0
      %703 = vmatpush1.xpose.msra.mxu0 0.0
      %704 = vmatprep.subr.mxu0 0.0
      %705 = vmatpush1.xpose.msra.mxu0 0.0
      %706 = vmatprep.subr.mxu0 0.0
      %707 = vmatpush1.xpose.msra.mxu0 0.0
      %708 = vmatprep.subr.mxu0 0.0
      %709 = vmatpush1.xpose.msra.mxu0 0.0
      %710 = vmatprep.subr.mxu0 0.0
      %711 = vmatpush1.xpose.msra.mxu0 0.0
      %712 = vmatprep.subr.mxu0 0.0
      %713 = vmatpush1.xpose.msra.mxu0 %v680
      %714 = vmatprep.subr.mxu0 0.0
      %715 = vmatpush2.xpose.msra.mxu0 0.0
      %716 = vmatprep.subr.mxu0 0.0
      %717 = vmatpush2.xpose.msra.mxu0 0.0
      %718 = vmatprep.subr.mxu0 0.0
      %719 = vmatpush2.xpose.msra.mxu0 0.0
      %720 = vmatprep.subr.mxu0 0.0
      %721 = vmatpush2.xpose.msra.mxu0 0.0
      %722 = vmatprep.subr.mxu0 0.0
      %723 = vmatpush2.xpose.msra.mxu0 0.0
      %724 = vmatprep.subr.mxu0 0.0
      %725 = vmatpush2.xpose.msra.mxu0 0.0
      %726 = vmatprep.subr.mxu0 0.0
      %727 = vmatpush2.xpose.msra.mxu0 0.0
      %728 = vmatprep.subr.mxu0 0.0
      %729 = vmatpush2.xpose.msra.mxu0 0.0
      %730 = vmatprep.subr.mxu0 0.0
      %731 = vmatpush2.xpose.msra.mxu0 0.0
      %732 = vmatprep.subr.mxu0 0.0
      %733 = vmatpush2.xpose.msra.mxu0 0.0
      %734 = vmatprep.subr.mxu0 0.0
      %735 = vmatpush2.xpose.msra.mxu0 0.0
      %736 = vmatprep.subr.mxu0 0.0
      %737 = vmatpush2.xpose.msra.mxu0 0.0
      %738 = vmatprep.subr.mxu0 0.0
      %739 = vmatpush2.xpose.msra.mxu0 0.0
      %740 = vmatprep.subr.mxu0 0.0
      %741 = vmatpush2.xpose.msra.mxu0 0.0
      %742 = vmatprep.subr.mxu0 0.0
      %743 = vmatpush2.xpose.msra.mxu0 0.0
      %744 = vmatprep.subr.mxu0 0.0
      %745 = vmatpush2.xpose.msra.mxu0 0.0
      %746 = vmatprep.mubr.f32.mxu0 0.0
      %747 = vmatmul.mubr.f32.gmra.mxu0 %v677
      %v748 = vpop.f32.mrf.mxu0
      %v749 = vadd.f32 0.0, %v748
      %v750 = vpop.f32.mrf.mxu0
      %751 = vdwg.mxu0
      %v752 = vld [vmem:[%s470] sm:$0x1]
      %vm753 = vcmp.ne.s32.totalorder %v752, 0
      %v754 = vsel %vm753, 1, 0
      %v755 = vlaneseq
      %v756 = vshrl.u32 %v755, 7
      %v757 = vsub.s32 0, %v756
      %v758 = vrot.slane %v754, %v757
      %vm759 = vcmp.eq.s32.totalorder %v758, 1
      %v760 = vsel %vm759, -1e+09, %v749
      %v761 = vsel %vm647, %v760, -inf
      %762 = vmax.xlane.f32.xlu0 %v761
      %v763 = vpop.xlane.xlu0 %762
      %v764 = vsub.f32 %v760, %v763
      %v765 = vmul.f32 %v764, 1.442695
      %v766 = vpow.pop %v765
      %v767 = vsel %vm647, %v766, 0.0
      %768 = vadd.xlane.f32.xlu0 %v767
      %v769 = vpop.xlane.xlu0 %768
      %v770 = vrcp.pop %v769
      %v771 = vmul.f32 %v766, %v770
      %773 = vrot.lane.b32.xlu0 %v642, 120
      %v774 = vpop.permute.xlu0 %773
      %v777 = vsel %vm647, %v771, 0
      %779 = vmatprep.subr.mxu0 0.0
      %780 = vmatpush1.msra.mxu0 0.0
      %781 = vmatprep.subr.mxu0 0.0
      %782 = vmatpush1.msra.mxu0 0.0
      %783 = vmatprep.subr.mxu0 0.0
      %784 = vmatpush1.msra.mxu0 0.0
      %785 = vmatprep.subr.mxu0 0.0
      %786 = vmatpush1.msra.mxu0 0.0
      %787 = vmatprep.subr.mxu0 0.0
      %788 = vmatpush1.msra.mxu0 0.0
      %789 = vmatprep.subr.mxu0 0.0
      %790 = vmatpush1.msra.mxu0 0.0
      %791 = vmatprep.subr.mxu0 0.0
      %792 = vmatpush1.msra.mxu0 0.0
      %793 = vmatprep.subr.mxu0 0.0
      %794 = vmatpush1.msra.mxu0 0.0
      %795 = vmatprep.subr.mxu0 0.0
      %796 = vmatpush1.msra.mxu0 0.0
      %797 = vmatprep.subr.mxu0 0.0
      %798 = vmatpush1.msra.mxu0 0.0
      %799 = vmatprep.subr.mxu0 0.0
      %800 = vmatpush1.msra.mxu0 0.0
      %801 = vmatprep.subr.mxu0 0.0
      %802 = vmatpush1.msra.mxu0 0.0
      %803 = vmatprep.subr.mxu0 0.0
      %804 = vmatpush1.msra.mxu0 0.0
      %805 = vmatprep.subr.mxu0 0.0
      %806 = vmatpush1.msra.mxu0 0.0
      %807 = vmatprep.subr.mxu0 0.0
      %808 = vmatpush1.msra.mxu0 0.0
      %809 = vmatprep.subr.mxu0 0.0
      %810 = vmatpush1.msra.mxu0 %v774
      %811 = vmatprep.subr.mxu0 0.0
      %812 = vmatpush2.msra.mxu0 0.0
      %813 = vmatprep.subr.mxu0 0.0
      %814 = vmatpush2.msra.mxu0 0.0
      %815 = vmatprep.subr.mxu0 0.0
      %816 = vmatpush2.msra.mxu0 0.0
      %817 = vmatprep.subr.mxu0 0.0
      %818 = vmatpush2.msra.mxu0 0.0
      %819 = vmatprep.subr.mxu0 0.0
      %820 = vmatpush2.msra.mxu0 0.0
      %821 = vmatprep.subr.mxu0 0.0
      %822 = vmatpush2.msra.mxu0 0.0
      %823 = vmatprep.subr.mxu0 0.0
      %824 = vmatpush2.msra.mxu0 0.0
      %825 = vmatprep.subr.mxu0 0.0
      %826 = vmatpush2.msra.mxu0 0.0
      %827 = vmatprep.subr.mxu0 0.0
      %828 = vmatpush2.msra.mxu0 0.0
      %829 = vmatprep.subr.mxu0 0.0
      %830 = vmatpush2.msra.mxu0 0.0
      %831 = vmatprep.subr.mxu0 0.0
      %832 = vmatpush2.msra.mxu0 0.0
      %833 = vmatprep.subr.mxu0 0.0
      %834 = vmatpush2.msra.mxu0 0.0
      %835 = vmatprep.subr.mxu0 0.0
      %836 = vmatpush2.msra.mxu0 0.0
      %837 = vmatprep.subr.mxu0 0.0
      %838 = vmatpush2.msra.mxu0 0.0
      %839 = vmatprep.subr.mxu0 0.0
      %840 = vmatpush2.msra.mxu0 0.0
      %841 = vmatprep.subr.mxu0 0.0
      %842 = vmatpush2.msra.mxu0 0.0
      %843 = vmatprep.mubr.f32.mxu0 0.0
      %844 = vmatmul.mubr.f32.gmra.mxu0 %v777
      %v845 = vpop.f32.mrf.mxu0
      %v846 = vadd.f32 0.0, %v845
      %v847 = vpop.f32.mrf.mxu0
      %848 = vdwg.mxu0
      %v849 = vld [vmem:[#allocation2] sm:$0xff]
      %v850 = vld [vmem:[%s474] sm:$0xff]
      %v852 = vsel %vm647, %v846, 0
      %854 = vmatprep.subr.mxu0 0.0
      %855 = vmatpush1.msra.mxu0 0.0
      %856 = vmatprep.subr.mxu0 0.0
      %857 = vmatpush1.msra.mxu0 0.0
      %858 = vmatprep.subr.mxu0 0.0
      %859 = vmatpush1.msra.mxu0 0.0
      %860 = vmatprep.subr.mxu0 0.0
      %861 = vmatpush1.msra.mxu0 0.0
      %862 = vmatprep.subr.mxu0 0.0
      %863 = vmatpush1.msra.mxu0 0.0
      %864 = vmatprep.subr.mxu0 0.0
      %865 = vmatpush1.msra.mxu0 0.0
      %866 = vmatprep.subr.mxu0 0.0
      %867 = vmatpush1.msra.mxu0 0.0
      %868 = vmatprep.subr.mxu0 0.0
      %869 = vmatpush1.msra.mxu0 0.0
      %870 = vmatprep.subr.mxu0 0.0
      %871 = vmatpush1.msra.mxu0 0.0
      %872 = vmatprep.subr.mxu0 0.0
      %873 = vmatpush1.msra.mxu0 0.0
      %874 = vmatprep.subr.mxu0 0.0
      %875 = vmatpush1.msra.mxu0 0.0
      %876 = vmatprep.subr.mxu0 0.0
      %877 = vmatpush1.msra.mxu0 0.0
      %878 = vmatprep.subr.mxu0 0.0
      %879 = vmatpush1.msra.mxu0 0.0
      %880 = vmatprep.subr.mxu0 0.0
      %881 = vmatpush1.msra.mxu0 0.0
      %882 = vmatprep.subr.mxu0 0.0
      %883 = vmatpush1.msra.mxu0 0.0
      %884 = vmatprep.subr.mxu0 0.0
      %885 = vmatpush1.msra.mxu0 %v850
      %886 = vmatprep.subr.mxu0 0.0
      %887 = vmatpush2.msra.mxu0 0.0
      %888 = vmatprep.subr.mxu0 0.0
      %889 = vmatpush2.msra.mxu0 0.0
      %890 = vmatprep.subr.mxu0 0.0
      %891 = vmatpush2.msra.mxu0 0.0
      %892 = vmatprep.subr.mxu0 0.0
      %893 = vmatpush2.msra.mxu0 0.0
      %894 = vmatprep.subr.mxu0 0.0
      %895 = vmatpush2.msra.mxu0 0.0
      %896 = vmatprep.subr.mxu0 0.0
      %897 = vmatpush2.msra.mxu0 0.0
      %898 = vmatprep.subr.mxu0 0.0
      %899 = vmatpush2.msra.mxu0 0.0
      %900 = vmatprep.subr.mxu0 0.0
      %901 = vmatpush2.msra.mxu0 0.0
      %902 = vmatprep.subr.mxu0 0.0
      %903 = vmatpush2.msra.mxu0 0.0
      %904 = vmatprep.subr.mxu0 0.0
      %905 = vmatpush2.msra.mxu0 0.0
      %906 = vmatprep.subr.mxu0 0.0
      %907 = vmatpush2.msra.mxu0 0.0
      %908 = vmatprep.subr.mxu0 0.0
      %909 = vmatpush2.msra.mxu0 0.0
      %910 = vmatprep.subr.mxu0 0.0
      %911 = vmatpush2.msra.mxu0 0.0
      %912 = vmatprep.subr.mxu0 0.0
      %913 = vmatpush2.msra.mxu0 0.0
      %914 = vmatprep.subr.mxu0 0.0
      %915 = vmatpush2.msra.mxu0 0.0
      %916 = vmatprep.subr.mxu0 0.0
      %917 = vmatpush2.msra.mxu0 0.0
      %918 = vmatprep.mubr.f32.mxu0 0.0
      %919 = vmatmul.mubr.f32.gmra.mxu0 %v852
      %v920 = vpop.f32.mrf.mxu0
      %v921 = vadd.f32 0.0, %v920
      %v922 = vpop.f32.mrf.mxu0
      %923 = vdwg.mxu0
      %v924 = vadd.f32 %v849, %v921
      %925 = vst.msk [vmem:[#allocation2] sm:$0xff] %vm494, %v924
      %p926 = scmp.eq.s32.totalorder %s27, 3
      // Predicated region
      $region61: #{ngpt_encoder_forward.5} parent=55 // pred_check
        %p927 = pneg %p926
      $region62: #{ngpt_encoder_forward.5} parent=55 // pred_check_branch
        %929 = sbr.rel (%p927) target = $region64
      $region63: #{ngpt_encoder_forward.5} parent=55 // pred_region
        %v930 = vld [vmem:[#allocation2] sm:$0xff]
        %v931 = vmul.f32 %v930, %v930
        %v932 = vsel %vm494, %v931, 0.0
        %933 = vadd.xlane.f32.xlu0 %v932
        %v934 = vpop.xlane.xlu0 %933
        %v935 = vmax.f32 %v934, 1e-12
        %v936 = vrsqrt.pop %v935
        %v937 = vmul.f32 %v930, %v936
        %v938 = vld [vmem:[%s8] sm:$0x1]
        %v939 = vsub.f32 %v937, %v488
        %v941 = vlaneseq
        %v942 = vshrl.u32 %v941, 7
        %v943 = vsub.s32 0, %v942
        %v944 = vrot.slane %v938, %v943
        %v946 = vmul.f32 %v944, %v939
        %v947 = vadd.f32 %v488, %v946
        %v948 = vmul.f32 %v947, %v947
        %v949 = vsel %vm494, %v948, 0.0
        %950 = vadd.xlane.f32.xlu0 %v949
        %v951 = vpop.xlane.xlu0 %950
        %v952 = vmax.f32 %v951, 1e-12
        %v953 = vrsqrt.pop %v952
        %v954 = vmul.f32 %v947, %v953
        %955 = vst.msk [vmem:[%s481] sm:$0xff] %vm494, %v954
      $region64: #{ngpt_encoder_forward.5} parent=55 // pred_fallthru
        _
      %p956 = scmp.lt.s32.totalorder %s25, 1
      %s957 = scalar_select %p956, %s25, 1
      %p958 = scmp.lt.s32.totalorder %s26, 0
      %s959 = scalar_select %p958, %s26, 0
      %s960 = sadd.s32 %s959, %s957
      %s961 = smul.addr %s960, 8
      %s962 = scalar_lea.vmem %s9, %s961
      // Predicated region
      $region65: #{ngpt_encoder_forward.5} parent=55 // pred_check
        %p963 = pneg %p290
      $region66: #{ngpt_encoder_forward.5} parent=55 // pred_check_branch
        %965 = sbr.rel (%p963) target = $region68
      $region67: #{ngpt_encoder_forward.5} parent=55 // pred_region
        _
      $region68: #{ngpt_encoder_forward.5} parent=55 // pred_fallthru
        _
    $region56: #{ngpt_encoder_forward.5} parent=5 // pred_fallthru
      _
    %p966 = scmp.le.s32.totalorder 2, %s15
    // Predicated region
    $region69: #{ngpt_encoder_forward.5} parent=5 // pred_check
      %p967 = pneg %p966
    $region70: #{ngpt_encoder_forward.5} parent=5 // pred_check_branch
      %969 = sbr.rel (%p967) target = $region72
    $region71: #{ngpt_encoder_forward.5} parent=5 // pred_region
      %s970 = ssub.s32 %s15, 2
      // Predicated region
      $region73: #{ngpt_encoder_forward.5} parent=71 // pred_check
        %p971 = pneg %p296
      $region74: #{ngpt_encoder_forward.5} parent=71 // pred_check_branch
        %973 = sbr.rel (%p971) target = $region76
      $region75: #{ngpt_encoder_forward.5} parent=71 // pred_region
        %p974 = scmp.lt.s32.totalorder %s28, 1
        %s975 = scalar_select %p974, %s28, 1
        %p976 = scmp.lt.s32.totalorder %s29, 0
        %s977 = scalar_select %p976, %s29, 0
        %s978 = sadd.s32 %s977, %s975
        %s979 = smul.addr %s978, 8
        %s980 = scalar_lea.vmem %s9, %s979
      $region76: #{ngpt_encoder_forward.5} parent=71 // pred_fallthru
        _
    $region72: #{ngpt_encoder_forward.5} parent=5 // pred_fallthru
      _
  $region6: #{ngpt_encoder_forward.5} parent=0 // loop_footer
    %s19 = sadd.s32 1, %s15
  $region7: #{ngpt_encoder_forward.5} parent=0 // loop_footer_branch
    %14 = sbr.rel target = $region3
  $region8: #{ngpt_encoder_forward.5} parent=0 // loop_exit
    _

</llo_original>
